<compile_context>
chip_gen: v7x
topology: tpu7x:2x2x1
jax: 0.10.0
libtpu: 0.0.40
codegen_flags: <defaults>
</compile_context>

<pallas_src>
import jax
import jax.numpy as jnp
from jax.experimental import pallas as pl
from jax.experimental.pallas import tpu as pltpu


# ---------------------------------------------------------------------------
# Kernels
# ---------------------------------------------------------------------------
def _conv3x3_bn_relu_kernel(x_ref, w_ref, bias_ref, o_ref, xp_ref):
    # x_ref:    (1, H, W, Cin)   f32 NHWC input (one image, full spatial)
    # w_ref:    (9*Cin, Ct)      bf16 weights, tap-major rows, BN scale folded in
    # bias_ref: (1, Ct)          f32 fused BN bias  (beta - mean * scale)
    # o_ref:    (1, Ho, Wo, Ct)  f32 output tile (Ct = Cout tile)
    # xp_ref:   (Hp, Wp, Cin)    f32 scratch holding the zero-padded image
    H, W, Cin = x_ref.shape[1], x_ref.shape[2], x_ref.shape[3]
    Ho, Wo, Ct = o_ref.shape[1], o_ref.shape[2], o_ref.shape[3]
    p = (xp_ref.shape[0] - H) // 2

    # In-kernel zero padding: avoids a full jnp.pad HBM round trip per layer.
    xp_ref[...] = jnp.zeros_like(xp_ref)
    xp_ref[pl.ds(p, H), pl.ds(p, W), :] = x_ref[0]

    # im2col: assemble one (Ho*Wo, 9*Cin) patch so the MXU sees K = 9*Cin
    # instead of 9 short K = Cin matmuls.
    cols = []
    for kh in range(3):
        for kw in range(3):
            cols.append(
                xp_ref[pl.ds(kh, Ho), pl.ds(kw, Wo), :].reshape(Ho * Wo, Cin)
            )
    patch = jnp.concatenate(cols, axis=-1).astype(jnp.bfloat16)   # (Ho*Wo, 9*Cin)

    acc = jnp.dot(patch, w_ref[...], preferred_element_type=jnp.float32)
    y = jnp.maximum(acc + bias_ref[...], 0.0)                      # bias + ReLU (f32)
    o_ref[...] = y.reshape(1, Ho, Wo, Ct)


def _maxpool2_kernel(x_ref, o_ref):
    # x_ref: (1, Ho, 2, Wo, 2, C) — the wrapper reshapes NHWC -> (N,Ho,2,Wo,2,C)
    # o_ref: (1, Ho, Wo, C)
    a = x_ref[0, :, 0, :, 0, :]
    b = x_ref[0, :, 0, :, 1, :]
    c = x_ref[0, :, 1, :, 0, :]
    d = x_ref[0, :, 1, :, 1, :]
    m = jnp.maximum(jnp.maximum(a, b), jnp.maximum(c, d))
    o_ref[...] = m.reshape(o_ref.shape)


# ---------------------------------------------------------------------------
# Wrappers around pallas_call
# ---------------------------------------------------------------------------
def conv3x3_bn_relu(x, w, scale, bias, padding=1):
    """x: (N, H, W, Cin) f32 NHWC.  w: (Cout, Cin, 3, 3) (PyTorch layout)."""
    N, H, W, Cin = x.shape
    Cout = w.shape[0]
    Ho = H + 2 * padding - 2
    Wo = W + 2 * padding - 2
    assert Ho >= 1 and Wo >= 1, "input too small for 3x3 conv with this padding"
    Hp, Wp = H + 2 * padding, W + 2 * padding

    # (Cout, Cin, 3, 3) -> (3, 3, Cin, Cout) -> (9*Cin, Cout); tap-major rows.
    wk = jnp.transpose(w, (2, 3, 1, 0)).reshape(9 * Cin, Cout).astype(jnp.float32)
    # Fold BN scale into the weights once (epilogue is just bias + ReLU).
    wk = (wk * scale.astype(jnp.float32)[None, :]).astype(jnp.bfloat16)
    bias2 = bias.reshape(1, Cout).astype(jnp.float32)

    # Tile Cout: keeps weight/output blocks bounded and adds a second parallel
    # grid axis (useful for v7x's 2 TensorCores when N is small).
    tc = 128 if (Cout % 128 == 0) else Cout
    n_ct = Cout // tc

    return pl.pallas_call(
        _conv3x3_bn_relu_kernel,
        out_shape=jax.ShapeDtypeStruct((N, Ho, Wo, Cout), jnp.float32),
        grid=(N, n_ct),
        in_specs=[
            pl.BlockSpec((1, H, W, Cin), lambda n, j: (n, 0, 0, 0)),
            pl.BlockSpec((9 * Cin, tc), lambda n, j: (0, j)),
            pl.BlockSpec((1, tc), lambda n, j: (0, j)),
        ],
        out_specs=pl.BlockSpec((1, Ho, Wo, tc), lambda n, j: (n, 0, 0, j)),
        scratch_shapes=[pltpu.VMEM((Hp, Wp, Cin), jnp.float32)],
        compiler_params=pltpu.CompilerParams(
            dimension_semantics=("parallel", "parallel"),
            vmem_limit_bytes=32 * 1024 * 1024,
        ),
    )(x.astype(jnp.float32), wk, bias2)


def maxpool2(x):
    """2x2 / stride-2 max pool on NHWC input (floor mode, like nn.MaxPool2d(2,2))."""
    N, H, W, C = x.shape
    assert H % 2 == 0 and W % 2 == 0, "maxpool2 expects even spatial dims"
    Ho, Wo = H // 2, W // 2
    # Free (metadata-only) reshape outside the kernel; avoids strided indexing.
    xr = x.reshape(N, Ho, 2, Wo, 2, C)
    return pl.pallas_call(
        _maxpool2_kernel,
        out_shape=jax.ShapeDtypeStruct((N, Ho, Wo, C), x.dtype),
        grid=(N,),
        in_specs=[
            pl.BlockSpec((1, Ho, 2, Wo, 2, C), lambda n: (n, 0, 0, 0, 0, 0))
        ],
        out_specs=pl.BlockSpec((1, Ho, Wo, C), lambda n: (n, 0, 0, 0)),
        compiler_params=pltpu.CompilerParams(
            dimension_semantics=("parallel",),
            vmem_limit_bytes=32 * 1024 * 1024,
        ),
    )(xr)


# ---------------------------------------------------------------------------
# Parameter construction (deterministic, synthetic)
# ---------------------------------------------------------------------------
def make_params(key, in_channels, out_channels, downhill):
    # Per-conv channel plan matching Encoder.__init__ / CNNBlocks(n_conv=2).
    defs = []
    cin, cout = in_channels, out_channels
    for _ in range(downhill):
        defs.append((cin, cout))
        defs.append((cout, cout))
        cin, cout = cout, cout * 2
    defs.append((cin, cout))
    defs.append((cout, cout))

    params = []
    for i, (ci, co) in enumerate(defs):
        kw_, kg, kb = jax.random.split(jax.random.fold_in(key, i), 3)
        w = jax.random.normal(kw_, (co, ci, 3, 3), jnp.float32) / jnp.sqrt(9.0 * ci)
        gamma = 1.0 + 0.1 * jax.random.normal(kg, (co,), jnp.float32)
        beta = 0.1 * jax.random.normal(kb, (co,), jnp.float32)
        running_mean = jnp.zeros((co,), jnp.float32)
        running_var = jnp.ones((co,), jnp.float32)
        scale = gamma / jnp.sqrt(running_var + 1e-5)
        bias = beta - running_mean * scale
        params.append((w, scale, bias))
    return params


# ---------------------------------------------------------------------------
# Encoder forward (matches PyTorch Encoder.forward)
# ---------------------------------------------------------------------------
def encoder_forward(x_nchw, params, padding=1, downhill=4):
    x = jnp.transpose(x_nchw, (0, 2, 3, 1)).astype(jnp.float32)   # NCHW -> NHWC
    routes_nhwc = []
    pi = 0
    for _ in range(downhill):
        for _ in range(2):                                        # CNNBlocks(n_conv=2)
            w, s, b = params[pi]; pi += 1
            x = conv3x3_bn_relu(x, w, s, b, padding=padding)
        routes_nhwc.append(x)                                     # route connection
        x = maxpool2(x)                                           # MaxPool2d(2, 2)
    for _ in range(2):                                            # final CNNBlocks
        w, s, b = params[pi]; pi += 1
        x = conv3x3_bn_relu(x, w, s, b, padding=padding)
    routes_nhwc.append(x)
    # Single NHWC -> NCHW conversion at the public boundary.
    routes = [jnp.transpose(r, (0, 3, 1, 2)) for r in routes_nhwc]
    return jnp.transpose(x, (0, 3, 1, 2)), routes


# ---------------------------------------------------------------------------
if __name__ == "__main__":
    key = jax.random.PRNGKey(0)
    kx, kp = jax.random.split(key)

    # small shapes: batch=2, in_channels=4, spatial=16x16
    N, C, H, W = 2, 4, 16, 16
    in_channels, out_channels, padding, downhill = 4, 8, 1, 4

    x = jax.random.normal(kx, (N, C, H, W), jnp.float32)
    params = make_params(kp, in_channels, out_channels, downhill)

    out, routes = encoder_forward(x, params, padding=padding, downhill=downhill)
    out = jax.block_until_ready(out)
    for r in routes:
        jax.block_until_ready(r)

    print("KERNEL_OK")
</pallas_src>

<mosaic_0001>
module attributes {stable_mosaic.version = 11 : i64} {
  func.func @_conv3x3_bn_relu_kernel(%arg0: i32, %arg1: i32, %arg2: memref<1x16x16x4xf32, #tpu.memory_space<vmem>>, %arg3: memref<36x8xbf16, #tpu.memory_space<vmem>>, %arg4: memref<1x8xf32, #tpu.memory_space<vmem>>, %arg5: memref<1x16x16x8xf32, #tpu.memory_space<vmem>>, %arg6: memref<18x18x4xf32, #tpu.memory_space<vmem>>) attributes {dimension_semantics = [#tpu.dimension_semantics<parallel>, #tpu.dimension_semantics<parallel>], iteration_bounds = array<i64: 2, 1>, scalar_prefetch = 0 : i64, scratch_operands = 1 : i64, tpu.core_type = #tpu.core_type<tc>, window_params = [{transform_indices = @transform_0, window_bounds = array<i64: 1, 16, 16, 4>}, {transform_indices = @transform_1, window_bounds = array<i64: 36, 8>}, {transform_indices = @transform_2, window_bounds = array<i64: 1, 8>}, {transform_indices = @transform_3, window_bounds = array<i64: 1, 16, 16, 8>}]} {
    %cst = arith.constant 0.000000e+00 : f32
    %0 = vector.broadcast %cst : f32 to vector<18x18x4xf32>
    %c0 = arith.constant 0 : index
    %c0_0 = arith.constant 0 : index
    %c0_1 = arith.constant 0 : index
    %1 = vector.load %arg6[%c0, %c0_0, %c0_1] : memref<18x18x4xf32, #tpu.memory_space<vmem>>, vector<18x18x4xf32>
    tpu.vector_store %arg6[%c0, %c0_0, %c0_1], %0 {strides = array<i32>} : memref<18x18x4xf32, #tpu.memory_space<vmem>>, vector<18x18x4xf32>,
    %c0_2 = arith.constant 0 : index
    %c0_3 = arith.constant 0 : index
    %c0_4 = arith.constant 0 : index
    %c0_5 = arith.constant 0 : index
    %2 = vector.load %arg2[%c0_2, %c0_3, %c0_4, %c0_5] : memref<1x16x16x4xf32, #tpu.memory_space<vmem>>, vector<1x16x16x4xf32>
    %3 = vector.shape_cast %2 : vector<1x16x16x4xf32> to vector<16x16x4xf32>
    %c1 = arith.constant 1 : index
    %c1_6 = arith.constant 1 : index
    %c0_7 = arith.constant 0 : index
    %4 = vector.load %arg6[%c1, %c1_6, %c0_7] : memref<18x18x4xf32, #tpu.memory_space<vmem>>, vector<16x16x4xf32>
    tpu.vector_store %arg6[%c1, %c1_6, %c0_7], %3 {strides = array<i32>} : memref<18x18x4xf32, #tpu.memory_space<vmem>>, vector<16x16x4xf32>,
    %c0_8 = arith.constant 0 : index
    %c0_9 = arith.constant 0 : index
    %c0_10 = arith.constant 0 : index
    %5 = vector.load %arg6[%c0_8, %c0_9, %c0_10] : memref<18x18x4xf32, #tpu.memory_space<vmem>>, vector<16x16x4xf32>
    %6 = vector.shape_cast %5 : vector<16x16x4xf32> to vector<256x4xf32>
    %c0_11 = arith.constant 0 : index
    %c1_12 = arith.constant 1 : index
    %c0_13 = arith.constant 0 : index
    %7 = vector.load %arg6[%c0_11, %c1_12, %c0_13] : memref<18x18x4xf32, #tpu.memory_space<vmem>>, vector<16x16x4xf32>
    %8 = vector.shape_cast %7 : vector<16x16x4xf32> to vector<256x4xf32>
    %c0_14 = arith.constant 0 : index
    %c2 = arith.constant 2 : index
    %c0_15 = arith.constant 0 : index
    %9 = vector.load %arg6[%c0_14, %c2, %c0_15] : memref<18x18x4xf32, #tpu.memory_space<vmem>>, vector<16x16x4xf32>
    %10 = vector.shape_cast %9 : vector<16x16x4xf32> to vector<256x4xf32>
    %c1_16 = arith.constant 1 : index
    %c0_17 = arith.constant 0 : index
    %c0_18 = arith.constant 0 : index
    %11 = vector.load %arg6[%c1_16, %c0_17, %c0_18] : memref<18x18x4xf32, #tpu.memory_space<vmem>>, vector<16x16x4xf32>
    %12 = vector.shape_cast %11 : vector<16x16x4xf32> to vector<256x4xf32>
    %c1_19 = arith.constant 1 : index
    %c1_20 = arith.constant 1 : index
    %c0_21 = arith.constant 0 : index
    %13 = vector.load %arg6[%c1_19, %c1_20, %c0_21] : memref<18x18x4xf32, #tpu.memory_space<vmem>>, vector<16x16x4xf32>
    %14 = vector.shape_cast %13 : vector<16x16x4xf32> to vector<256x4xf32>
    %c1_22 = arith.constant 1 : index
    %c2_23 = arith.constant 2 : index
    %c0_24 = arith.constant 0 : index
    %15 = vector.load %arg6[%c1_22, %c2_23, %c0_24] : memref<18x18x4xf32, #tpu.memory_space<vmem>>, vector<16x16x4xf32>
    %16 = vector.shape_cast %15 : vector<16x16x4xf32> to vector<256x4xf32>
    %c2_25 = arith.constant 2 : index
    %c0_26 = arith.constant 0 : index
    %c0_27 = arith.constant 0 : index
    %17 = vector.load %arg6[%c2_25, %c0_26, %c0_27] : memref<18x18x4xf32, #tpu.memory_space<vmem>>, vector<16x16x4xf32>
    %18 = vector.shape_cast %17 : vector<16x16x4xf32> to vector<256x4xf32>
    %c2_28 = arith.constant 2 : index
    %c1_29 = arith.constant 1 : index
    %c0_30 = arith.constant 0 : index
    %19 = vector.load %arg6[%c2_28, %c1_29, %c0_30] : memref<18x18x4xf32, #tpu.memory_space<vmem>>, vector<16x16x4xf32>
    %20 = vector.shape_cast %19 : vector<16x16x4xf32> to vector<256x4xf32>
    %c2_31 = arith.constant 2 : index
    %c2_32 = arith.constant 2 : index
    %c0_33 = arith.constant 0 : index
    %21 = vector.load %arg6[%c2_31, %c2_32, %c0_33] : memref<18x18x4xf32, #tpu.memory_space<vmem>>, vector<16x16x4xf32>
    %22 = vector.shape_cast %21 : vector<16x16x4xf32> to vector<256x4xf32>
    %23 = tpu.concatenate %6, %8, %10, %12, %14, %16, %18, %20, %22 in 1 : vector<256x4xf32>, vector<256x4xf32>, vector<256x4xf32>, vector<256x4xf32>, vector<256x4xf32>, vector<256x4xf32>, vector<256x4xf32>, vector<256x4xf32>, vector<256x4xf32> -> vector<256x36xf32>
    %24 = arith.truncf %23 : vector<256x36xf32> to vector<256x36xbf16>
    %c0_34 = arith.constant 0 : index
    %c0_35 = arith.constant 0 : index
    %25 = vector.load %arg3[%c0_34, %c0_35] : memref<36x8xbf16, #tpu.memory_space<vmem>>, vector<36x8xbf16>
    %cst_36 = arith.constant dense<0.000000e+00> : vector<256x8xf32>
    %26 = tpu.matmul %24, %25, %cst_36 {dimension_numbers = #tpu.dot_dimension_numbers<[1], [0], [0], [1], [0, 0, 1, 1], [], []>} : vector<256x36xbf16>, vector<36x8xbf16>, vector<256x8xf32> -> vector<256x8xf32>
    %c0_37 = arith.constant 0 : index
    %c0_38 = arith.constant 0 : index
    %27 = vector.load %arg4[%c0_37, %c0_38] : memref<1x8xf32, #tpu.memory_space<vmem>>, vector<1x8xf32>
    %28 = vector.broadcast %27 : vector<1x8xf32> to vector<256x8xf32>
    %29 = arith.addf %26, %28 : vector<256x8xf32>
    %cst_39 = arith.constant 0.000000e+00 : f32
    %30 = vector.broadcast %cst_39 : f32 to vector<256x8xf32>
    %31 = arith.maximumf %29, %30 : vector<256x8xf32>
    %32 = vector.shape_cast %31 : vector<256x8xf32> to vector<1x16x16x8xf32>
    %c0_40 = arith.constant 0 : index
    %c0_41 = arith.constant 0 : index
    %c0_42 = arith.constant 0 : index
    %c0_43 = arith.constant 0 : index
    %33 = vector.load %arg5[%c0_40, %c0_41, %c0_42, %c0_43] : memref<1x16x16x8xf32, #tpu.memory_space<vmem>>, vector<1x16x16x8xf32>
    tpu.vector_store %arg5[%c0_40, %c0_41, %c0_42, %c0_43], %32 {strides = array<i32>} : memref<1x16x16x8xf32, #tpu.memory_space<vmem>>, vector<1x16x16x8xf32>,
    return
  }
  func.func @transform_0(%arg0: i32, %arg1: i32) -> (i32, i32, i32, i32) {
    %c0_i32 = arith.constant 0 : i32
    %c0_i32_0 = arith.constant 0 : i32
    %c0_i32_1 = arith.constant 0 : i32
    %c0_i32_2 = arith.constant 0 : i32
    return %arg0, %c0_i32, %c0_i32_0, %c0_i32_1 : i32, i32, i32, i32
  }
  func.func @transform_1(%arg0: i32, %arg1: i32) -> (i32, i32) {
    %c0_i32 = arith.constant 0 : i32
    %c0_i32_0 = arith.constant 0 : i32
    return %c0_i32, %arg1 : i32, i32
  }
  func.func @transform_2(%arg0: i32, %arg1: i32) -> (i32, i32) {
    %c0_i32 = arith.constant 0 : i32
    %c0_i32_0 = arith.constant 0 : i32
    return %c0_i32, %arg1 : i32, i32
  }
  func.func @transform_3(%arg0: i32, %arg1: i32) -> (i32, i32, i32, i32) {
    %c0_i32 = arith.constant 0 : i32
    %c0_i32_0 = arith.constant 0 : i32
    %c0_i32_1 = arith.constant 0 : i32
    return %arg0, %c0_i32, %c0_i32_0, %arg1 : i32, i32, i32, i32
  }
}

</mosaic_0001>

<llo_original>
// kernel: tpu_custom_call.1
$region0: #{tpu_custom_call.1}
  #allocation0 [shape = 'u32[]', space=smem, size = 0x4, offset = 0x4, fixed_abs, tag = 'smem constant byte address 0x4 - core index']
  #allocation1 [shape = 'u32[144,128]{1,0:T(1,128)}', space=vmem, size = 0x12000, scoped, tag = 'internal scratch']
  #allocation2 [shape = 'f32[18,18,4]{2,1,0:T(8,128)}', space=vmem, size = 0x36000, scoped, tag = 'scratch operand']
  %s0 = inlined_call_operand.vmem [shape: f32[2,16,16,4], index: 0, kind: input, shape index: {}]
  %s1 = inlined_call_operand.vmem [shape: bf16[36,8], index: 1, kind: input, shape index: {}]
  %s2 = inlined_call_operand.vmem [shape: f32[1,8], index: 2, kind: input, shape index: {}]
  %s3 = inlined_call_operand.vmem [shape: f32[2,16,16,8], index: 3, kind: output, shape index: {}]
  %s4 = sld [smem:[#allocation0]]
  $region45: #{tpu_custom_call.1} parent=0
    _
  %s6 = ssub.s32 1, %s4
  %s7 = scalar_select 0, %s6, %s4
  loop: start=0, step=1, limit=4
  $region2: #{tpu_custom_call.1} parent=0 // loop_pre_header
    _
  $region3: #{tpu_custom_call.1} parent=0 // loop_header
    %s9 = sphi 0, %s13
    %p10 = scmp.ge.s32.totalorder %s9, 4
    %s16 = sphi 0, %s28
    %s17 = sphi 0, %s24
    %s18 = sphi 0, %s16
    %s19 = sphi 0, %s17
    %s20 = sphi 0, %s18
    %s21 = sphi 0, %s19
    %s31 = sphi 0, %s33
    %s34 = sphi 0, %s31
    %s35 = sphi 0, %s34
    %s51 = sphi 0, %s35
    %s57 = sphi 0, %s59
    %s60 = sphi 0, %s57
    %s61 = sphi 0, %s60
    %s77 = sphi 0, %s61
    %s83 = sphi 0, %s85
    %s86 = sphi 0, %s83
    %s87 = sphi 0, %s86
    %s103 = sphi 0, %s87
    %s111 = sphi 0, %s113
    %s114 = sphi 0, %s111
    %s115 = sphi 0, %s114
    %s131 = sphi 0, %s115
  $region4: #{tpu_custom_call.1} parent=0 // loop_header_branch
    %12 = sbr.rel (%p10) target = $region8
  $region5: #{tpu_custom_call.1} parent=0 // loop_body
    %s14 = ssub.s32 %s9, 1
    %s15 = ssub.s32 %s9, 2
    %s22 = sadd.s32 1, %s17
    %p23 = scmp.ge.s32.totalorder %s22, 1
    %s24 = scalar_select %p23, 0, %s22
    %s25 = sadd.s32 1, %s16
    %s26 = scalar_select %p23, %s25, %s16
    %p27 = scmp.ge.s32.totalorder %s26, 2
    %s28 = scalar_select %p27, 0, %s26
    %s29 = ssub.s32 %s16, %s28
    %p30 = scmp.eq.s32.totalorder %s29, 0
    %s32 = sadd.s32 %s31, 1
    %s33 = scalar_select %p30, %s31, %s32
    %p36 = pneg %p30
    %p37 = scmp.eq.s32.totalorder %s9, 1
    %p38 = por %p36, %p37
    %p39 = scmp.ne.s32.totalorder %s31, %s34
    %p40 = scmp.eq.s32.totalorder %s9, 0
    %p41 = por %p39, %p40
    %p42 = scmp.ne.s32.totalorder %s31, %s34
    %p43 = scmp.eq.s32.totalorder %s14, 1
    %p44 = por %p42, %p43
    %p45 = scmp.ne.s32.totalorder %s34, %s35
    %p46 = scmp.eq.s32.totalorder %s14, 0
    %p47 = por %p45, %p46
    %p48 = scmp.ne.s32.totalorder %s34, %s35
    %p49 = scmp.eq.s32.totalorder %s15, 1
    %p50 = por %p48, %p49
    %p52 = scmp.ne.s32.totalorder %s35, %s51
    %p53 = scmp.eq.s32.totalorder %s15, 0
    %p54 = por %p52, %p53
    %s55 = ssub.s32 %s17, %s24
    %p56 = scmp.eq.s32.totalorder %s55, 0
    %s58 = sadd.s32 %s57, 1
    %s59 = scalar_select %p56, %s57, %s58
    %p62 = pneg %p56
    %p63 = scmp.eq.s32.totalorder %s9, 1
    %p64 = por %p62, %p63
    %p65 = scmp.ne.s32.totalorder %s57, %s60
    %p66 = scmp.eq.s32.totalorder %s9, 0
    %p67 = por %p65, %p66
    %p68 = scmp.ne.s32.totalorder %s57, %s60
    %p69 = scmp.eq.s32.totalorder %s14, 1
    %p70 = por %p68, %p69
    %p71 = scmp.ne.s32.totalorder %s60, %s61
    %p72 = scmp.eq.s32.totalorder %s14, 0
    %p73 = por %p71, %p72
    %p74 = scmp.ne.s32.totalorder %s60, %s61
    %p75 = scmp.eq.s32.totalorder %s15, 1
    %p76 = por %p74, %p75
    %p78 = scmp.ne.s32.totalorder %s61, %s77
    %p79 = scmp.eq.s32.totalorder %s15, 0
    %p80 = por %p78, %p79
    %s81 = ssub.s32 %s17, %s24
    %p82 = scmp.eq.s32.totalorder %s81, 0
    %s84 = sadd.s32 %s83, 1
    %s85 = scalar_select %p82, %s83, %s84
    %p88 = pneg %p82
    %p89 = scmp.eq.s32.totalorder %s9, 1
    %p90 = por %p88, %p89
    %p91 = scmp.ne.s32.totalorder %s83, %s86
    %p92 = scmp.eq.s32.totalorder %s9, 0
    %p93 = por %p91, %p92
    %p94 = scmp.ne.s32.totalorder %s83, %s86
    %p95 = scmp.eq.s32.totalorder %s14, 1
    %p96 = por %p94, %p95
    %p97 = scmp.ne.s32.totalorder %s86, %s87
    %p98 = scmp.eq.s32.totalorder %s14, 0
    %p99 = por %p97, %p98
    %p100 = scmp.ne.s32.totalorder %s86, %s87
    %p101 = scmp.eq.s32.totalorder %s15, 1
    %p102 = por %p100, %p101
    %p104 = scmp.ne.s32.totalorder %s87, %s103
    %p105 = scmp.eq.s32.totalorder %s15, 0
    %p106 = por %p104, %p105
    %s107 = ssub.s32 %s16, %s28
    %s108 = ssub.s32 %s17, %s24
    %s109 = sor.u32 %s107, %s108
    %p110 = scmp.eq.s32.totalorder %s109, 0
    %s112 = sadd.s32 %s111, 1
    %s113 = scalar_select %p110, %s111, %s112
    %p116 = pneg %p110
    %p117 = scmp.eq.s32.totalorder %s9, 1
    %p118 = por %p116, %p117
    %p119 = scmp.ne.s32.totalorder %s111, %s114
    %p120 = scmp.eq.s32.totalorder %s9, 0
    %p121 = por %p119, %p120
    %p122 = scmp.ne.s32.totalorder %s111, %s114
    %p123 = scmp.eq.s32.totalorder %s14, 1
    %p124 = por %p122, %p123
    %p125 = scmp.ne.s32.totalorder %s114, %s115
    %p126 = scmp.eq.s32.totalorder %s14, 0
    %p127 = por %p125, %p126
    %p128 = scmp.ne.s32.totalorder %s114, %s115
    %p129 = scmp.eq.s32.totalorder %s15, 1
    %p130 = por %p128, %p129
    %p132 = scmp.ne.s32.totalorder %s115, %s131
    %p133 = scmp.eq.s32.totalorder %s15, 0
    %p134 = por %p132, %p133
    %p135 = scmp.le.s32.totalorder 1, %s9
    %p136 = scmp.lt.s32.totalorder %s9, 3
    %p137 = pnand %p135, %p136
    %p138 = pneg %p137
    // Predicated region
    $region9: #{tpu_custom_call.1} parent=5 // pred_check
      _
    $region10: #{tpu_custom_call.1} parent=5 // pred_check_branch
      %140 = sbr.rel (%p137) target = $region12
    $region11: #{tpu_custom_call.1} parent=5 // pred_region
      %s141 = ssub.s32 %s9, 1
      // Predicated region
      $region13: #{tpu_custom_call.1} parent=11 // pred_check
        %p142 = pneg %p73
      $region14: #{tpu_custom_call.1} parent=11 // pred_check_branch
        %144 = sbr.rel (%p142) target = $region16
      $region15: #{tpu_custom_call.1} parent=11 // pred_region
        %p145 = scmp.lt.s32.totalorder %s19, 0
        %s146 = scalar_select %p145, %s19, 0
        %s147 = smul.addr %s146, 4
        %s148 = scalar_lea.vmem %s1, %s147
      $region16: #{tpu_custom_call.1} parent=11 // pred_fallthru
        _
      // Predicated region
      $region17: #{tpu_custom_call.1} parent=11 // pred_check
        %p149 = pneg %p99
      $region18: #{tpu_custom_call.1} parent=11 // pred_check_branch
        %151 = sbr.rel (%p149) target = $region20
      $region19: #{tpu_custom_call.1} parent=11 // pred_region
        %p152 = scmp.lt.s32.totalorder %s19, 0
        %s153 = scalar_select %p152, %s19, 0
        %s154 = scalar_lea.vmem %s2, %s153
      $region20: #{tpu_custom_call.1} parent=11 // pred_fallthru
        _
    $region12: #{tpu_custom_call.1} parent=5 // pred_fallthru
      _
    %p155 = scmp.lt.s32.totalorder %s9, 2
    // Predicated region
    $region21: #{tpu_custom_call.1} parent=5 // pred_check
      %p156 = pneg %p155
    $region22: #{tpu_custom_call.1} parent=5 // pred_check_branch
      %158 = sbr.rel (%p156) target = $region24
    $region23: #{tpu_custom_call.1} parent=5 // pred_region
      // Predicated region
      $region25: #{tpu_custom_call.1} parent=23 // pred_check
        %p159 = pneg %p41
      $region26: #{tpu_custom_call.1} parent=23 // pred_check_branch
        %161 = sbr.rel (%p159) target = $region28
      $region27: #{tpu_custom_call.1} parent=23 // pred_region
        %p162 = scmp.lt.s32.totalorder %s16, 1
        %s163 = scalar_select %p162, %s16, 1
        %s164 = smul.addr %s163, 32
        %s165 = smul.addr %s164, 8
        %s166 = scalar_lea.vmem %s0, %s165
      $region28: #{tpu_custom_call.1} parent=23 // pred_fallthru
        _
    $region24: #{tpu_custom_call.1} parent=5 // pred_fallthru
      _
    %p167 = scmp.le.s32.totalorder 1, %s9
    %p168 = scmp.lt.s32.totalorder %s9, 3
    %p169 = pnand %p167, %p168
    %p170 = pneg %p169
    // Predicated region
    $region29: #{tpu_custom_call.1} parent=5 // pred_check
      _
    $region30: #{tpu_custom_call.1} parent=5 // pred_check_branch
      %172 = sbr.rel (%p169) target = $region32
    $region31: #{tpu_custom_call.1} parent=5 // pred_region
      %s173 = ssub.s32 %s9, 1
      %p174 = scmp.lt.s32.totalorder %s18, 1
      %s175 = scalar_select %p174, %s18, 1
      %s176 = smul.addr %s175, 32
      %s177 = smul.addr %s176, 8
      %s178 = scalar_lea.vmem %s0, %s177
      %p179 = pneg %p47
      %p180 = pneg %p44
      %p181 = scmp.lt.s32.totalorder %s19, 0
      %s182 = scalar_select %p181, %s19, 0
      %s183 = smul.addr %s182, 4
      %s184 = scalar_lea.vmem %s1, %s183
      %p185 = pneg %p73
      %p186 = pneg %p70
      %p187 = scmp.lt.s32.totalorder %s19, 0
      %s188 = scalar_select %p187, %s19, 0
      %s189 = scalar_lea.vmem %s2, %s188
      %p190 = pneg %p99
      %p191 = pneg %p96
      %p192 = pneg %p127
      %p193 = pneg %p124
      %p194 = scmp.lt.s32.totalorder %s18, 1
      %s195 = scalar_select %p194, %s18, 1
      %p196 = scmp.lt.s32.totalorder %s19, 0
      %s197 = scalar_select %p196, %s19, 0
      %s198 = smul.addr %s195, 32
      %s199 = sadd.s32 %s197, %s198
      %s200 = smul.addr %s199, 8
      %s201 = scalar_lea.vmem %s3, %s200
      %p202 = scmp.lt.s32.totalorder %s18, 1
      %s203 = scalar_select %p202, %s18, 1
      %s204 = smul.addr %s203, 32
      %s205 = smul.addr %s204, 8
      %s206 = scalar_lea.vmem %s0, %s205
      %p207 = scmp.lt.s32.totalorder %s19, 0
      %s208 = scalar_select %p207, %s19, 0
      %s209 = smul.addr %s208, 4
      %s210 = scalar_lea.vmem %s1, %s209
      %p211 = scmp.lt.s32.totalorder %s19, 0
      %s212 = scalar_select %p211, %s19, 0
      %s213 = scalar_lea.vmem %s2, %s212
      %p214 = scmp.lt.s32.totalorder %s18, 1
      %s215 = scalar_select %p214, %s18, 1
      %p216 = scmp.lt.s32.totalorder %s19, 0
      %s217 = scalar_select %p216, %s19, 0
      %s218 = smul.addr %s215, 32
      %s219 = sadd.s32 %s217, %s218
      %s220 = smul.addr %s219, 8
      %s221 = scalar_lea.vmem %s3, %s220
      %vm223 = vcmask 31744
      %224 = vst.msk [vmem:[#allocation2] sm:$0xff] %vm223, 0.0
      %225 = vst.msk [vmem:[#allocation2 + $0x8] sm:$0xff] %vm223, 0.0
      %vm226 = vcmask 25600
      %227 = vst.msk [vmem:[#allocation2 + $0x10] sm:$0x3] %vm226, 0.0
      %228 = vst.msk [vmem:[#allocation2 + $0x18] sm:$0xff] %vm223, 0.0
      %229 = vst.msk [vmem:[#allocation2 + $0x20] sm:$0xff] %vm223, 0.0
      %230 = vst.msk [vmem:[#allocation2 + $0x28] sm:$0x3] %vm226, 0.0
      %231 = vst.msk [vmem:[#allocation2 + $0x30] sm:$0xff] %vm223, 0.0
      %232 = vst.msk [vmem:[#allocation2 + $0x38] sm:$0xff] %vm223, 0.0
      %233 = vst.msk [vmem:[#allocation2 + $0x40] sm:$0x3] %vm226, 0.0
      %234 = vst.msk [vmem:[#allocation2 + $0x48] sm:$0xff] %vm223, 0.0
      %235 = vst.msk [vmem:[#allocation2 + $0x50] sm:$0xff] %vm223, 0.0
      %236 = vst.msk [vmem:[#allocation2 + $0x58] sm:$0x3] %vm226, 0.0
      %237 = vst.msk [vmem:[#allocation2 + $0x60] sm:$0xff] %vm223, 0.0
      %238 = vst.msk [vmem:[#allocation2 + $0x68] sm:$0xff] %vm223, 0.0
      %239 = vst.msk [vmem:[#allocation2 + $0x70] sm:$0x3] %vm226, 0.0
      %240 = vst.msk [vmem:[#allocation2 + $0x78] sm:$0xff] %vm223, 0.0
      %241 = vst.msk [vmem:[#allocation2 + $0x80] sm:$0xff] %vm223, 0.0
      %242 = vst.msk [vmem:[#allocation2 + $0x88] sm:$0x3] %vm226, 0.0
      %243 = vst.msk [vmem:[#allocation2 + $0x90] sm:$0xff] %vm223, 0.0
      %244 = vst.msk [vmem:[#allocation2 + $0x98] sm:$0xff] %vm223, 0.0
      %245 = vst.msk [vmem:[#allocation2 + $0xa0] sm:$0x3] %vm226, 0.0
      %246 = vst.msk [vmem:[#allocation2 + $0xa8] sm:$0xff] %vm223, 0.0
      %247 = vst.msk [vmem:[#allocation2 + $0xb0] sm:$0xff] %vm223, 0.0
      %248 = vst.msk [vmem:[#allocation2 + $0xb8] sm:$0x3] %vm226, 0.0
      %249 = vst.msk [vmem:[#allocation2 + $0xc0] sm:$0xff] %vm223, 0.0
      %250 = vst.msk [vmem:[#allocation2 + $0xc8] sm:$0xff] %vm223, 0.0
      %251 = vst.msk [vmem:[#allocation2 + $0xd0] sm:$0x3] %vm226, 0.0
      %252 = vst.msk [vmem:[#allocation2 + $0xd8] sm:$0xff] %vm223, 0.0
      %253 = vst.msk [vmem:[#allocation2 + $0xe0] sm:$0xff] %vm223, 0.0
      %254 = vst.msk [vmem:[#allocation2 + $0xe8] sm:$0x3] %vm226, 0.0
      %255 = vst.msk [vmem:[#allocation2 + $0xf0] sm:$0xff] %vm223, 0.0
      %256 = vst.msk [vmem:[#allocation2 + $0xf8] sm:$0xff] %vm223, 0.0
      %257 = vst.msk [vmem:[#allocation2 + $0x100] sm:$0x3] %vm226, 0.0
      %258 = vst.msk [vmem:[#allocation2 + $0x108] sm:$0xff] %vm223, 0.0
      %259 = vst.msk [vmem:[#allocation2 + $0x110] sm:$0xff] %vm223, 0.0
      %260 = vst.msk [vmem:[#allocation2 + $0x118] sm:$0x3] %vm226, 0.0
      %261 = vst.msk [vmem:[#allocation2 + $0x120] sm:$0xff] %vm223, 0.0
      %262 = vst.msk [vmem:[#allocation2 + $0x128] sm:$0xff] %vm223, 0.0
      %263 = vst.msk [vmem:[#allocation2 + $0x130] sm:$0x3] %vm226, 0.0
      %264 = vst.msk [vmem:[#allocation2 + $0x138] sm:$0xff] %vm223, 0.0
      %265 = vst.msk [vmem:[#allocation2 + $0x140] sm:$0xff] %vm223, 0.0
      %266 = vst.msk [vmem:[#allocation2 + $0x148] sm:$0x3] %vm226, 0.0
      %267 = vst.msk [vmem:[#allocation2 + $0x150] sm:$0xff] %vm223, 0.0
      %268 = vst.msk [vmem:[#allocation2 + $0x158] sm:$0xff] %vm223, 0.0
      %269 = vst.msk [vmem:[#allocation2 + $0x160] sm:$0x3] %vm226, 0.0
      %270 = vst.msk [vmem:[#allocation2 + $0x168] sm:$0xff] %vm223, 0.0
      %271 = vst.msk [vmem:[#allocation2 + $0x170] sm:$0xff] %vm223, 0.0
      %272 = vst.msk [vmem:[#allocation2 + $0x178] sm:$0x3] %vm226, 0.0
      %273 = vst.msk [vmem:[#allocation2 + $0x180] sm:$0xff] %vm223, 0.0
      %274 = vst.msk [vmem:[#allocation2 + $0x188] sm:$0xff] %vm223, 0.0
      %275 = vst.msk [vmem:[#allocation2 + $0x190] sm:$0x3] %vm226, 0.0
      %276 = vst.msk [vmem:[#allocation2 + $0x198] sm:$0xff] %vm223, 0.0
      %277 = vst.msk [vmem:[#allocation2 + $0x1a0] sm:$0xff] %vm223, 0.0
      %278 = vst.msk [vmem:[#allocation2 + $0x1a8] sm:$0x3] %vm226, 0.0
      %v279 = vld [vmem:[%s206] sm:$0xff]
      %v280 = vld [vmem:[%s206 + $0x8] sm:$0xff]
      %v281 = vld [vmem:[%s206 + $0x10] sm:$0xff]
      %v282 = vld [vmem:[%s206 + $0x18] sm:$0xff]
      %v283 = vld [vmem:[%s206 + $0x20] sm:$0xff]
      %v284 = vld [vmem:[%s206 + $0x28] sm:$0xff]
      %v285 = vld [vmem:[%s206 + $0x30] sm:$0xff]
      %v286 = vld [vmem:[%s206 + $0x38] sm:$0xff]
      %v287 = vld [vmem:[%s206 + $0x40] sm:$0xff]
      %v288 = vld [vmem:[%s206 + $0x48] sm:$0xff]
      %v289 = vld [vmem:[%s206 + $0x50] sm:$0xff]
      %v290 = vld [vmem:[%s206 + $0x58] sm:$0xff]
      %v291 = vld [vmem:[%s206 + $0x60] sm:$0xff]
      %v292 = vld [vmem:[%s206 + $0x68] sm:$0xff]
      %v293 = vld [vmem:[%s206 + $0x70] sm:$0xff]
      %v294 = vld [vmem:[%s206 + $0x78] sm:$0xff]
      %v295 = vld [vmem:[%s206 + $0x80] sm:$0xff]
      %v296 = vld [vmem:[%s206 + $0x88] sm:$0xff]
      %v297 = vld [vmem:[%s206 + $0x90] sm:$0xff]
      %v298 = vld [vmem:[%s206 + $0x98] sm:$0xff]
      %v299 = vld [vmem:[%s206 + $0xa0] sm:$0xff]
      %v300 = vld [vmem:[%s206 + $0xa8] sm:$0xff]
      %v301 = vld [vmem:[%s206 + $0xb0] sm:$0xff]
      %v302 = vld [vmem:[%s206 + $0xb8] sm:$0xff]
      %v303 = vld [vmem:[%s206 + $0xc0] sm:$0xff]
      %v304 = vld [vmem:[%s206 + $0xc8] sm:$0xff]
      %v305 = vld [vmem:[%s206 + $0xd0] sm:$0xff]
      %v306 = vld [vmem:[%s206 + $0xd8] sm:$0xff]
      %v307 = vld [vmem:[%s206 + $0xe0] sm:$0xff]
      %v308 = vld [vmem:[%s206 + $0xe8] sm:$0xff]
      %v309 = vld [vmem:[%s206 + $0xf0] sm:$0xff]
      %v310 = vld [vmem:[%s206 + $0xf8] sm:$0xff]
      %s311 = scalar_lea.vmem [#allocation2], 24
      %312 = vst.msk [vmem:[%s311 + $0x1] sm:$0xff] %vm223, %v279
      %313 = vst.msk [vmem:[%s311 + $0x9] sm:$0xff] %vm223, %v280
      %314 = vst.msk [vmem:[%s311 + $0x19] sm:$0xff] %vm223, %v281
      %315 = vst.msk [vmem:[%s311 + $0x21] sm:$0xff] %vm223, %v282
      %316 = vst.msk [vmem:[%s311 + $0x31] sm:$0xff] %vm223, %v283
      %317 = vst.msk [vmem:[%s311 + $0x39] sm:$0xff] %vm223, %v284
      %318 = vst.msk [vmem:[%s311 + $0x49] sm:$0xff] %vm223, %v285
      %319 = vst.msk [vmem:[%s311 + $0x51] sm:$0xff] %vm223, %v286
      %320 = vst.msk [vmem:[%s311 + $0x61] sm:$0xff] %vm223, %v287
      %321 = vst.msk [vmem:[%s311 + $0x69] sm:$0xff] %vm223, %v288
      %322 = vst.msk [vmem:[%s311 + $0x79] sm:$0xff] %vm223, %v289
      %323 = vst.msk [vmem:[%s311 + $0x81] sm:$0xff] %vm223, %v290
      %324 = vst.msk [vmem:[%s311 + $0x91] sm:$0xff] %vm223, %v291
      %325 = vst.msk [vmem:[%s311 + $0x99] sm:$0xff] %vm223, %v292
      %326 = vst.msk [vmem:[%s311 + $0xa9] sm:$0xff] %vm223, %v293
      %327 = vst.msk [vmem:[%s311 + $0xb1] sm:$0xff] %vm223, %v294
      %328 = vst.msk [vmem:[%s311 + $0xc1] sm:$0xff] %vm223, %v295
      %329 = vst.msk [vmem:[%s311 + $0xc9] sm:$0xff] %vm223, %v296
      %330 = vst.msk [vmem:[%s311 + $0xd9] sm:$0xff] %vm223, %v297
      %331 = vst.msk [vmem:[%s311 + $0xe1] sm:$0xff] %vm223, %v298
      %332 = vst.msk [vmem:[%s311 + $0xf1] sm:$0xff] %vm223, %v299
      %333 = vst.msk [vmem:[%s311 + $0xf9] sm:$0xff] %vm223, %v300
      %334 = vst.msk [vmem:[%s311 + $0x109] sm:$0xff] %vm223, %v301
      %335 = vst.msk [vmem:[%s311 + $0x111] sm:$0xff] %vm223, %v302
      %336 = vst.msk [vmem:[%s311 + $0x121] sm:$0xff] %vm223, %v303
      %337 = vst.msk [vmem:[%s311 + $0x129] sm:$0xff] %vm223, %v304
      %338 = vst.msk [vmem:[%s311 + $0x139] sm:$0xff] %vm223, %v305
      %339 = vst.msk [vmem:[%s311 + $0x141] sm:$0xff] %vm223, %v306
      %340 = vst.msk [vmem:[%s311 + $0x151] sm:$0xff] %vm223, %v307
      %341 = vst.msk [vmem:[%s311 + $0x159] sm:$0xff] %vm223, %v308
      %342 = vst.msk [vmem:[%s311 + $0x169] sm:$0xff] %vm223, %v309
      %343 = vst.msk [vmem:[%s311 + $0x171] sm:$0xff] %vm223, %v310
      %v344 = vld [vmem:[#allocation2] sm:$0xff]
      %v345 = vld [vmem:[#allocation2 + $0x8] sm:$0xff]
      %v346 = vld [vmem:[#allocation2 + $0x18] sm:$0xff]
      %v347 = vld [vmem:[#allocation2 + $0x20] sm:$0xff]
      %v348 = vld [vmem:[#allocation2 + $0x30] sm:$0xff]
      %v349 = vld [vmem:[#allocation2 + $0x38] sm:$0xff]
      %v350 = vld [vmem:[#allocation2 + $0x48] sm:$0xff]
      %v351 = vld [vmem:[#allocation2 + $0x50] sm:$0xff]
      %v352 = vld [vmem:[#allocation2 + $0x60] sm:$0xff]
      %v353 = vld [vmem:[#allocation2 + $0x68] sm:$0xff]
      %v354 = vld [vmem:[#allocation2 + $0x78] sm:$0xff]
      %v355 = vld [vmem:[#allocation2 + $0x80] sm:$0xff]
      %v356 = vld [vmem:[#allocation2 + $0x90] sm:$0xff]
      %v357 = vld [vmem:[#allocation2 + $0x98] sm:$0xff]
      %v358 = vld [vmem:[#allocation2 + $0xa8] sm:$0xff]
      %v359 = vld [vmem:[#allocation2 + $0xb0] sm:$0xff]
      %v360 = vld [vmem:[#allocation2 + $0xc0] sm:$0xff]
      %v361 = vld [vmem:[#allocation2 + $0xc8] sm:$0xff]
      %v362 = vld [vmem:[#allocation2 + $0xd8] sm:$0xff]
      %v363 = vld [vmem:[#allocation2 + $0xe0] sm:$0xff]
      %v364 = vld [vmem:[#allocation2 + $0xf0] sm:$0xff]
      %v365 = vld [vmem:[#allocation2 + $0xf8] sm:$0xff]
      %v366 = vld [vmem:[#allocation2 + $0x108] sm:$0xff]
      %v367 = vld [vmem:[#allocation2 + $0x110] sm:$0xff]
      %v368 = vld [vmem:[#allocation2 + $0x120] sm:$0xff]
      %v369 = vld [vmem:[#allocation2 + $0x128] sm:$0xff]
      %v370 = vld [vmem:[#allocation2 + $0x138] sm:$0xff]
      %v371 = vld [vmem:[#allocation2 + $0x140] sm:$0xff]
      %v372 = vld [vmem:[#allocation2 + $0x150] sm:$0xff]
      %v373 = vld [vmem:[#allocation2 + $0x158] sm:$0xff]
      %v374 = vld [vmem:[#allocation2 + $0x168] sm:$0xff]
      %v375 = vld [vmem:[#allocation2 + $0x170] sm:$0xff]
      %v376 = vld [vmem:[#allocation2 + $0x1] sm:$0xff]
      %v377 = vld [vmem:[#allocation2 + $0x9] sm:$0xff]
      %v378 = vld [vmem:[#allocation2 + $0x19] sm:$0xff]
      %v379 = vld [vmem:[#allocation2 + $0x21] sm:$0xff]
      %v380 = vld [vmem:[#allocation2 + $0x31] sm:$0xff]
      %v381 = vld [vmem:[#allocation2 + $0x39] sm:$0xff]
      %v382 = vld [vmem:[#allocation2 + $0x49] sm:$0xff]
      %v383 = vld [vmem:[#allocation2 + $0x51] sm:$0xff]
      %v384 = vld [vmem:[#allocation2 + $0x61] sm:$0xff]
      %v385 = vld [vmem:[#allocation2 + $0x69] sm:$0xff]
      %v386 = vld [vmem:[#allocation2 + $0x79] sm:$0xff]
      %v387 = vld [vmem:[#allocation2 + $0x81] sm:$0xff]
      %v388 = vld [vmem:[#allocation2 + $0x91] sm:$0xff]
      %v389 = vld [vmem:[#allocation2 + $0x99] sm:$0xff]
      %v390 = vld [vmem:[#allocation2 + $0xa9] sm:$0xff]
      %v391 = vld [vmem:[#allocation2 + $0xb1] sm:$0xff]
      %v392 = vld [vmem:[#allocation2 + $0xc1] sm:$0xff]
      %v393 = vld [vmem:[#allocation2 + $0xc9] sm:$0xff]
      %v394 = vld [vmem:[#allocation2 + $0xd9] sm:$0xff]
      %v395 = vld [vmem:[#allocation2 + $0xe1] sm:$0xff]
      %v396 = vld [vmem:[#allocation2 + $0xf1] sm:$0xff]
      %v397 = vld [vmem:[#allocation2 + $0xf9] sm:$0xff]
      %v398 = vld [vmem:[#allocation2 + $0x109] sm:$0xff]
      %v399 = vld [vmem:[#allocation2 + $0x111] sm:$0xff]
      %v400 = vld [vmem:[#allocation2 + $0x121] sm:$0xff]
      %v401 = vld [vmem:[#allocation2 + $0x129] sm:$0xff]
      %v402 = vld [vmem:[#allocation2 + $0x139] sm:$0xff]
      %v403 = vld [vmem:[#allocation2 + $0x141] sm:$0xff]
      %v404 = vld [vmem:[#allocation2 + $0x151] sm:$0xff]
      %v405 = vld [vmem:[#allocation2 + $0x159] sm:$0xff]
      %v406 = vld [vmem:[#allocation2 + $0x169] sm:$0xff]
      %v407 = vld [vmem:[#allocation2 + $0x171] sm:$0xff]
      %v408 = vld [vmem:[#allocation2 + $0x2] sm:$0xff]
      %v409 = vld [vmem:[#allocation2 + $0xa] sm:$0xff]
      %v410 = vld [vmem:[#allocation2 + $0x1a] sm:$0xff]
      %v411 = vld [vmem:[#allocation2 + $0x22] sm:$0xff]
      %v412 = vld [vmem:[#allocation2 + $0x32] sm:$0xff]
      %v413 = vld [vmem:[#allocation2 + $0x3a] sm:$0xff]
      %v414 = vld [vmem:[#allocation2 + $0x4a] sm:$0xff]
      %v415 = vld [vmem:[#allocation2 + $0x52] sm:$0xff]
      %v416 = vld [vmem:[#allocation2 + $0x62] sm:$0xff]
      %v417 = vld [vmem:[#allocation2 + $0x6a] sm:$0xff]
      %v418 = vld [vmem:[#allocation2 + $0x7a] sm:$0xff]
      %v419 = vld [vmem:[#allocation2 + $0x82] sm:$0xff]
      %v420 = vld [vmem:[#allocation2 + $0x92] sm:$0xff]
      %v421 = vld [vmem:[#allocation2 + $0x9a] sm:$0xff]
      %v422 = vld [vmem:[#allocation2 + $0xaa] sm:$0xff]
      %v423 = vld [vmem:[#allocation2 + $0xb2] sm:$0xff]
      %v424 = vld [vmem:[#allocation2 + $0xc2] sm:$0xff]
      %v425 = vld [vmem:[#allocation2 + $0xca] sm:$0xff]
      %v426 = vld [vmem:[#allocation2 + $0xda] sm:$0xff]
      %v427 = vld [vmem:[#allocation2 + $0xe2] sm:$0xff]
      %v428 = vld [vmem:[#allocation2 + $0xf2] sm:$0xff]
      %v429 = vld [vmem:[#allocation2 + $0xfa] sm:$0xff]
      %v430 = vld [vmem:[#allocation2 + $0x10a] sm:$0xff]
      %v431 = vld [vmem:[#allocation2 + $0x112] sm:$0xff]
      %v432 = vld [vmem:[#allocation2 + $0x122] sm:$0xff]
      %v433 = vld [vmem:[#allocation2 + $0x12a] sm:$0xff]
      %v434 = vld [vmem:[#allocation2 + $0x13a] sm:$0xff]
      %v435 = vld [vmem:[#allocation2 + $0x142] sm:$0xff]
      %v436 = vld [vmem:[#allocation2 + $0x152] sm:$0xff]
      %v437 = vld [vmem:[#allocation2 + $0x15a] sm:$0xff]
      %v438 = vld [vmem:[#allocation2 + $0x16a] sm:$0xff]
      %v439 = vld [vmem:[#allocation2 + $0x172] sm:$0xff]
      %v440 = vld [vmem:[%s311] sm:$0xff]
      %v441 = vld [vmem:[%s311 + $0x8] sm:$0xff]
      %v442 = vld [vmem:[%s311 + $0x18] sm:$0xff]
      %v443 = vld [vmem:[%s311 + $0x20] sm:$0xff]
      %v444 = vld [vmem:[%s311 + $0x30] sm:$0xff]
      %v445 = vld [vmem:[%s311 + $0x38] sm:$0xff]
      %v446 = vld [vmem:[%s311 + $0x48] sm:$0xff]
      %v447 = vld [vmem:[%s311 + $0x50] sm:$0xff]
      %v448 = vld [vmem:[%s311 + $0x60] sm:$0xff]
      %v449 = vld [vmem:[%s311 + $0x68] sm:$0xff]
      %v450 = vld [vmem:[%s311 + $0x78] sm:$0xff]
      %v451 = vld [vmem:[%s311 + $0x80] sm:$0xff]
      %v452 = vld [vmem:[%s311 + $0x90] sm:$0xff]
      %v453 = vld [vmem:[%s311 + $0x98] sm:$0xff]
      %v454 = vld [vmem:[%s311 + $0xa8] sm:$0xff]
      %v455 = vld [vmem:[%s311 + $0xb0] sm:$0xff]
      %v456 = vld [vmem:[%s311 + $0xc0] sm:$0xff]
      %v457 = vld [vmem:[%s311 + $0xc8] sm:$0xff]
      %v458 = vld [vmem:[%s311 + $0xd8] sm:$0xff]
      %v459 = vld [vmem:[%s311 + $0xe0] sm:$0xff]
      %v460 = vld [vmem:[%s311 + $0xf0] sm:$0xff]
      %v461 = vld [vmem:[%s311 + $0xf8] sm:$0xff]
      %v462 = vld [vmem:[%s311 + $0x108] sm:$0xff]
      %v463 = vld [vmem:[%s311 + $0x110] sm:$0xff]
      %v464 = vld [vmem:[%s311 + $0x120] sm:$0xff]
      %v465 = vld [vmem:[%s311 + $0x128] sm:$0xff]
      %v466 = vld [vmem:[%s311 + $0x138] sm:$0xff]
      %v467 = vld [vmem:[%s311 + $0x140] sm:$0xff]
      %v468 = vld [vmem:[%s311 + $0x150] sm:$0xff]
      %v469 = vld [vmem:[%s311 + $0x158] sm:$0xff]
      %v470 = vld [vmem:[%s311 + $0x168] sm:$0xff]
      %v471 = vld [vmem:[%s311 + $0x170] sm:$0xff]
      %v472 = vld [vmem:[%s311 + $0x1] sm:$0xff]
      %v473 = vld [vmem:[%s311 + $0x9] sm:$0xff]
      %v474 = vld [vmem:[%s311 + $0x19] sm:$0xff]
      %v475 = vld [vmem:[%s311 + $0x21] sm:$0xff]
      %v476 = vld [vmem:[%s311 + $0x31] sm:$0xff]
      %v477 = vld [vmem:[%s311 + $0x39] sm:$0xff]
      %v478 = vld [vmem:[%s311 + $0x49] sm:$0xff]
      %v479 = vld [vmem:[%s311 + $0x51] sm:$0xff]
      %v480 = vld [vmem:[%s311 + $0x61] sm:$0xff]
      %v481 = vld [vmem:[%s311 + $0x69] sm:$0xff]
      %v482 = vld [vmem:[%s311 + $0x79] sm:$0xff]
      %v483 = vld [vmem:[%s311 + $0x81] sm:$0xff]
      %v484 = vld [vmem:[%s311 + $0x91] sm:$0xff]
      %v485 = vld [vmem:[%s311 + $0x99] sm:$0xff]
      %v486 = vld [vmem:[%s311 + $0xa9] sm:$0xff]
      %v487 = vld [vmem:[%s311 + $0xb1] sm:$0xff]
      %v488 = vld [vmem:[%s311 + $0xc1] sm:$0xff]
      %v489 = vld [vmem:[%s311 + $0xc9] sm:$0xff]
      %v490 = vld [vmem:[%s311 + $0xd9] sm:$0xff]
      %v491 = vld [vmem:[%s311 + $0xe1] sm:$0xff]
      %v492 = vld [vmem:[%s311 + $0xf1] sm:$0xff]
      %v493 = vld [vmem:[%s311 + $0xf9] sm:$0xff]
      %v494 = vld [vmem:[%s311 + $0x109] sm:$0xff]
      %v495 = vld [vmem:[%s311 + $0x111] sm:$0xff]
      %v496 = vld [vmem:[%s311 + $0x121] sm:$0xff]
      %v497 = vld [vmem:[%s311 + $0x129] sm:$0xff]
      %v498 = vld [vmem:[%s311 + $0x139] sm:$0xff]
      %v499 = vld [vmem:[%s311 + $0x141] sm:$0xff]
      %v500 = vld [vmem:[%s311 + $0x151] sm:$0xff]
      %v501 = vld [vmem:[%s311 + $0x159] sm:$0xff]
      %v502 = vld [vmem:[%s311 + $0x169] sm:$0xff]
      %v503 = vld [vmem:[%s311 + $0x171] sm:$0xff]
      %v504 = vld [vmem:[%s311 + $0x2] sm:$0xff]
      %v505 = vld [vmem:[%s311 + $0xa] sm:$0xff]
      %v506 = vld [vmem:[%s311 + $0x1a] sm:$0xff]
      %v507 = vld [vmem:[%s311 + $0x22] sm:$0xff]
      %v508 = vld [vmem:[%s311 + $0x32] sm:$0xff]
      %v509 = vld [vmem:[%s311 + $0x3a] sm:$0xff]
      %v510 = vld [vmem:[%s311 + $0x4a] sm:$0xff]
      %v511 = vld [vmem:[%s311 + $0x52] sm:$0xff]
      %v512 = vld [vmem:[%s311 + $0x62] sm:$0xff]
      %v513 = vld [vmem:[%s311 + $0x6a] sm:$0xff]
      %v514 = vld [vmem:[%s311 + $0x7a] sm:$0xff]
      %v515 = vld [vmem:[%s311 + $0x82] sm:$0xff]
      %v516 = vld [vmem:[%s311 + $0x92] sm:$0xff]
      %v517 = vld [vmem:[%s311 + $0x9a] sm:$0xff]
      %v518 = vld [vmem:[%s311 + $0xaa] sm:$0xff]
      %v519 = vld [vmem:[%s311 + $0xb2] sm:$0xff]
      %v520 = vld [vmem:[%s311 + $0xc2] sm:$0xff]
      %v521 = vld [vmem:[%s311 + $0xca] sm:$0xff]
      %v522 = vld [vmem:[%s311 + $0xda] sm:$0xff]
      %v523 = vld [vmem:[%s311 + $0xe2] sm:$0xff]
      %v524 = vld [vmem:[%s311 + $0xf2] sm:$0xff]
      %v525 = vld [vmem:[%s311 + $0xfa] sm:$0xff]
      %v526 = vld [vmem:[%s311 + $0x10a] sm:$0xff]
      %v527 = vld [vmem:[%s311 + $0x112] sm:$0xff]
      %v528 = vld [vmem:[%s311 + $0x122] sm:$0xff]
      %v529 = vld [vmem:[%s311 + $0x12a] sm:$0xff]
      %v530 = vld [vmem:[%s311 + $0x13a] sm:$0xff]
      %v531 = vld [vmem:[%s311 + $0x142] sm:$0xff]
      %v532 = vld [vmem:[%s311 + $0x152] sm:$0xff]
      %v533 = vld [vmem:[%s311 + $0x15a] sm:$0xff]
      %v534 = vld [vmem:[%s311 + $0x16a] sm:$0xff]
      %v535 = vld [vmem:[%s311 + $0x172] sm:$0xff]
      %s536 = scalar_lea.vmem [#allocation2], 48
      %v537 = vld [vmem:[%s536] sm:$0xff]
      %v538 = vld [vmem:[%s536 + $0x8] sm:$0xff]
      %v539 = vld [vmem:[%s536 + $0x18] sm:$0xff]
      %v540 = vld [vmem:[%s536 + $0x20] sm:$0xff]
      %v541 = vld [vmem:[%s536 + $0x30] sm:$0xff]
      %v542 = vld [vmem:[%s536 + $0x38] sm:$0xff]
      %v543 = vld [vmem:[%s536 + $0x48] sm:$0xff]
      %v544 = vld [vmem:[%s536 + $0x50] sm:$0xff]
      %v545 = vld [vmem:[%s536 + $0x60] sm:$0xff]
      %v546 = vld [vmem:[%s536 + $0x68] sm:$0xff]
      %v547 = vld [vmem:[%s536 + $0x78] sm:$0xff]
      %v548 = vld [vmem:[%s536 + $0x80] sm:$0xff]
      %v549 = vld [vmem:[%s536 + $0x90] sm:$0xff]
      %v550 = vld [vmem:[%s536 + $0x98] sm:$0xff]
      %v551 = vld [vmem:[%s536 + $0xa8] sm:$0xff]
      %v552 = vld [vmem:[%s536 + $0xb0] sm:$0xff]
      %v553 = vld [vmem:[%s536 + $0xc0] sm:$0xff]
      %v554 = vld [vmem:[%s536 + $0xc8] sm:$0xff]
      %v555 = vld [vmem:[%s536 + $0xd8] sm:$0xff]
      %v556 = vld [vmem:[%s536 + $0xe0] sm:$0xff]
      %v557 = vld [vmem:[%s536 + $0xf0] sm:$0xff]
      %v558 = vld [vmem:[%s536 + $0xf8] sm:$0xff]
      %v559 = vld [vmem:[%s536 + $0x108] sm:$0xff]
      %v560 = vld [vmem:[%s536 + $0x110] sm:$0xff]
      %v561 = vld [vmem:[%s536 + $0x120] sm:$0xff]
      %v562 = vld [vmem:[%s536 + $0x128] sm:$0xff]
      %v563 = vld [vmem:[%s536 + $0x138] sm:$0xff]
      %v564 = vld [vmem:[%s536 + $0x140] sm:$0xff]
      %v565 = vld [vmem:[%s536 + $0x150] sm:$0xff]
      %v566 = vld [vmem:[%s536 + $0x158] sm:$0xff]
      %v567 = vld [vmem:[%s536 + $0x168] sm:$0xff]
      %v568 = vld [vmem:[%s536 + $0x170] sm:$0xff]
      %v569 = vld [vmem:[%s536 + $0x1] sm:$0xff]
      %v570 = vld [vmem:[%s536 + $0x9] sm:$0xff]
      %v571 = vld [vmem:[%s536 + $0x19] sm:$0xff]
      %v572 = vld [vmem:[%s536 + $0x21] sm:$0xff]
      %v573 = vld [vmem:[%s536 + $0x31] sm:$0xff]
      %v574 = vld [vmem:[%s536 + $0x39] sm:$0xff]
      %v575 = vld [vmem:[%s536 + $0x49] sm:$0xff]
      %v576 = vld [vmem:[%s536 + $0x51] sm:$0xff]
      %v577 = vld [vmem:[%s536 + $0x61] sm:$0xff]
      %v578 = vld [vmem:[%s536 + $0x69] sm:$0xff]
      %v579 = vld [vmem:[%s536 + $0x79] sm:$0xff]
      %v580 = vld [vmem:[%s536 + $0x81] sm:$0xff]
      %v581 = vld [vmem:[%s536 + $0x91] sm:$0xff]
      %v582 = vld [vmem:[%s536 + $0x99] sm:$0xff]
      %v583 = vld [vmem:[%s536 + $0xa9] sm:$0xff]
      %v584 = vld [vmem:[%s536 + $0xb1] sm:$0xff]
      %v585 = vld [vmem:[%s536 + $0xc1] sm:$0xff]
      %v586 = vld [vmem:[%s536 + $0xc9] sm:$0xff]
      %v587 = vld [vmem:[%s536 + $0xd9] sm:$0xff]
      %v588 = vld [vmem:[%s536 + $0xe1] sm:$0xff]
      %v589 = vld [vmem:[%s536 + $0xf1] sm:$0xff]
      %v590 = vld [vmem:[%s536 + $0xf9] sm:$0xff]
      %v591 = vld [vmem:[%s536 + $0x109] sm:$0xff]
      %v592 = vld [vmem:[%s536 + $0x111] sm:$0xff]
      %v593 = vld [vmem:[%s536 + $0x121] sm:$0xff]
      %v594 = vld [vmem:[%s536 + $0x129] sm:$0xff]
      %v595 = vld [vmem:[%s536 + $0x139] sm:$0xff]
      %v596 = vld [vmem:[%s536 + $0x141] sm:$0xff]
      %v597 = vld [vmem:[%s536 + $0x151] sm:$0xff]
      %v598 = vld [vmem:[%s536 + $0x159] sm:$0xff]
      %v599 = vld [vmem:[%s536 + $0x169] sm:$0xff]
      %v600 = vld [vmem:[%s536 + $0x171] sm:$0xff]
      %v601 = vld [vmem:[%s536 + $0x2] sm:$0xff]
      %v602 = vld [vmem:[%s536 + $0xa] sm:$0xff]
      %v603 = vld [vmem:[%s536 + $0x1a] sm:$0xff]
      %v604 = vld [vmem:[%s536 + $0x22] sm:$0xff]
      %v605 = vld [vmem:[%s536 + $0x32] sm:$0xff]
      %v606 = vld [vmem:[%s536 + $0x3a] sm:$0xff]
      %v607 = vld [vmem:[%s536 + $0x4a] sm:$0xff]
      %v608 = vld [vmem:[%s536 + $0x52] sm:$0xff]
      %v609 = vld [vmem:[%s536 + $0x62] sm:$0xff]
      %v610 = vld [vmem:[%s536 + $0x6a] sm:$0xff]
      %v611 = vld [vmem:[%s536 + $0x7a] sm:$0xff]
      %v612 = vld [vmem:[%s536 + $0x82] sm:$0xff]
      %v613 = vld [vmem:[%s536 + $0x92] sm:$0xff]
      %v614 = vld [vmem:[%s536 + $0x9a] sm:$0xff]
      %v615 = vld [vmem:[%s536 + $0xaa] sm:$0xff]
      %v616 = vld [vmem:[%s536 + $0xb2] sm:$0xff]
      %v617 = vld [vmem:[%s536 + $0xc2] sm:$0xff]
      %v618 = vld [vmem:[%s536 + $0xca] sm:$0xff]
      %v619 = vld [vmem:[%s536 + $0xda] sm:$0xff]
      %v620 = vld [vmem:[%s536 + $0xe2] sm:$0xff]
      %v621 = vld [vmem:[%s536 + $0xf2] sm:$0xff]
      %v622 = vld [vmem:[%s536 + $0xfa] sm:$0xff]
      %v623 = vld [vmem:[%s536 + $0x10a] sm:$0xff]
      %v624 = vld [vmem:[%s536 + $0x112] sm:$0xff]
      %v625 = vld [vmem:[%s536 + $0x122] sm:$0xff]
      %v626 = vld [vmem:[%s536 + $0x12a] sm:$0xff]
      %v627 = vld [vmem:[%s536 + $0x13a] sm:$0xff]
      %v628 = vld [vmem:[%s536 + $0x142] sm:$0xff]
      %v629 = vld [vmem:[%s536 + $0x152] sm:$0xff]
      %v630 = vld [vmem:[%s536 + $0x15a] sm:$0xff]
      %v631 = vld [vmem:[%s536 + $0x16a] sm:$0xff]
      %v632 = vld [vmem:[%s536 + $0x172] sm:$0xff]
      %665 = vrot.lane.b32.xlu0 %v376, 4
      %v666 = vpop.permute.xlu0 %665
      %667 = vrot.lane.b32.xlu0 %v377, 4
      %v668 = vpop.permute.xlu0 %667
      %669 = vrot.lane.b32.xlu0 %v378, 4
      %v670 = vpop.permute.xlu0 %669
      %671 = vrot.lane.b32.xlu0 %v379, 4
      %v672 = vpop.permute.xlu0 %671
      %673 = vrot.lane.b32.xlu0 %v380, 4
      %v674 = vpop.permute.xlu0 %673
      %675 = vrot.lane.b32.xlu0 %v381, 4
      %v676 = vpop.permute.xlu0 %675
      %677 = vrot.lane.b32.xlu0 %v382, 4
      %v678 = vpop.permute.xlu0 %677
      %679 = vrot.lane.b32.xlu0 %v383, 4
      %v680 = vpop.permute.xlu0 %679
      %681 = vrot.lane.b32.xlu0 %v384, 4
      %v682 = vpop.permute.xlu0 %681
      %683 = vrot.lane.b32.xlu0 %v385, 4
      %v684 = vpop.permute.xlu0 %683
      %685 = vrot.lane.b32.xlu0 %v386, 4
      %v686 = vpop.permute.xlu0 %685
      %687 = vrot.lane.b32.xlu0 %v387, 4
      %v688 = vpop.permute.xlu0 %687
      %689 = vrot.lane.b32.xlu0 %v388, 4
      %v690 = vpop.permute.xlu0 %689
      %691 = vrot.lane.b32.xlu0 %v389, 4
      %v692 = vpop.permute.xlu0 %691
      %693 = vrot.lane.b32.xlu0 %v390, 4
      %v694 = vpop.permute.xlu0 %693
      %695 = vrot.lane.b32.xlu0 %v391, 4
      %v696 = vpop.permute.xlu0 %695
      %697 = vrot.lane.b32.xlu0 %v392, 4
      %v698 = vpop.permute.xlu0 %697
      %699 = vrot.lane.b32.xlu0 %v393, 4
      %v700 = vpop.permute.xlu0 %699
      %701 = vrot.lane.b32.xlu0 %v394, 4
      %v702 = vpop.permute.xlu0 %701
      %703 = vrot.lane.b32.xlu0 %v395, 4
      %v704 = vpop.permute.xlu0 %703
      %705 = vrot.lane.b32.xlu0 %v396, 4
      %v706 = vpop.permute.xlu0 %705
      %707 = vrot.lane.b32.xlu0 %v397, 4
      %v708 = vpop.permute.xlu0 %707
      %709 = vrot.lane.b32.xlu0 %v398, 4
      %v710 = vpop.permute.xlu0 %709
      %711 = vrot.lane.b32.xlu0 %v399, 4
      %v712 = vpop.permute.xlu0 %711
      %713 = vrot.lane.b32.xlu0 %v400, 4
      %v714 = vpop.permute.xlu0 %713
      %715 = vrot.lane.b32.xlu0 %v401, 4
      %v716 = vpop.permute.xlu0 %715
      %717 = vrot.lane.b32.xlu0 %v402, 4
      %v718 = vpop.permute.xlu0 %717
      %719 = vrot.lane.b32.xlu0 %v403, 4
      %v720 = vpop.permute.xlu0 %719
      %721 = vrot.lane.b32.xlu0 %v404, 4
      %v722 = vpop.permute.xlu0 %721
      %723 = vrot.lane.b32.xlu0 %v405, 4
      %v724 = vpop.permute.xlu0 %723
      %725 = vrot.lane.b32.xlu0 %v406, 4
      %v726 = vpop.permute.xlu0 %725
      %727 = vrot.lane.b32.xlu0 %v407, 4
      %v728 = vpop.permute.xlu0 %727
      %793 = vrot.lane.b32.xlu0 %v408, 8
      %v794 = vpop.permute.xlu0 %793
      %795 = vrot.lane.b32.xlu0 %v409, 8
      %v796 = vpop.permute.xlu0 %795
      %797 = vrot.lane.b32.xlu0 %v410, 8
      %v798 = vpop.permute.xlu0 %797
      %799 = vrot.lane.b32.xlu0 %v411, 8
      %v800 = vpop.permute.xlu0 %799
      %801 = vrot.lane.b32.xlu0 %v412, 8
      %v802 = vpop.permute.xlu0 %801
      %803 = vrot.lane.b32.xlu0 %v413, 8
      %v804 = vpop.permute.xlu0 %803
      %805 = vrot.lane.b32.xlu0 %v414, 8
      %v806 = vpop.permute.xlu0 %805
      %807 = vrot.lane.b32.xlu0 %v415, 8
      %v808 = vpop.permute.xlu0 %807
      %809 = vrot.lane.b32.xlu0 %v416, 8
      %v810 = vpop.permute.xlu0 %809
      %811 = vrot.lane.b32.xlu0 %v417, 8
      %v812 = vpop.permute.xlu0 %811
      %813 = vrot.lane.b32.xlu0 %v418, 8
      %v814 = vpop.permute.xlu0 %813
      %815 = vrot.lane.b32.xlu0 %v419, 8
      %v816 = vpop.permute.xlu0 %815
      %817 = vrot.lane.b32.xlu0 %v420, 8
      %v818 = vpop.permute.xlu0 %817
      %819 = vrot.lane.b32.xlu0 %v421, 8
      %v820 = vpop.permute.xlu0 %819
      %821 = vrot.lane.b32.xlu0 %v422, 8
      %v822 = vpop.permute.xlu0 %821
      %823 = vrot.lane.b32.xlu0 %v423, 8
      %v824 = vpop.permute.xlu0 %823
      %825 = vrot.lane.b32.xlu0 %v424, 8
      %v826 = vpop.permute.xlu0 %825
      %827 = vrot.lane.b32.xlu0 %v425, 8
      %v828 = vpop.permute.xlu0 %827
      %829 = vrot.lane.b32.xlu0 %v426, 8
      %v830 = vpop.permute.xlu0 %829
      %831 = vrot.lane.b32.xlu0 %v427, 8
      %v832 = vpop.permute.xlu0 %831
      %833 = vrot.lane.b32.xlu0 %v428, 8
      %v834 = vpop.permute.xlu0 %833
      %835 = vrot.lane.b32.xlu0 %v429, 8
      %v836 = vpop.permute.xlu0 %835
      %837 = vrot.lane.b32.xlu0 %v430, 8
      %v838 = vpop.permute.xlu0 %837
      %839 = vrot.lane.b32.xlu0 %v431, 8
      %v840 = vpop.permute.xlu0 %839
      %841 = vrot.lane.b32.xlu0 %v432, 8
      %v842 = vpop.permute.xlu0 %841
      %843 = vrot.lane.b32.xlu0 %v433, 8
      %v844 = vpop.permute.xlu0 %843
      %845 = vrot.lane.b32.xlu0 %v434, 8
      %v846 = vpop.permute.xlu0 %845
      %847 = vrot.lane.b32.xlu0 %v435, 8
      %v848 = vpop.permute.xlu0 %847
      %849 = vrot.lane.b32.xlu0 %v436, 8
      %v850 = vpop.permute.xlu0 %849
      %851 = vrot.lane.b32.xlu0 %v437, 8
      %v852 = vpop.permute.xlu0 %851
      %853 = vrot.lane.b32.xlu0 %v438, 8
      %v854 = vpop.permute.xlu0 %853
      %855 = vrot.lane.b32.xlu0 %v439, 8
      %v856 = vpop.permute.xlu0 %855
      %921 = vrot.lane.b32.xlu0 %v440, 12
      %v922 = vpop.permute.xlu0 %921
      %923 = vrot.lane.b32.xlu0 %v441, 12
      %v924 = vpop.permute.xlu0 %923
      %925 = vrot.lane.b32.xlu0 %v442, 12
      %v926 = vpop.permute.xlu0 %925
      %927 = vrot.lane.b32.xlu0 %v443, 12
      %v928 = vpop.permute.xlu0 %927
      %929 = vrot.lane.b32.xlu0 %v444, 12
      %v930 = vpop.permute.xlu0 %929
      %931 = vrot.lane.b32.xlu0 %v445, 12
      %v932 = vpop.permute.xlu0 %931
      %933 = vrot.lane.b32.xlu0 %v446, 12
      %v934 = vpop.permute.xlu0 %933
      %935 = vrot.lane.b32.xlu0 %v447, 12
      %v936 = vpop.permute.xlu0 %935
      %937 = vrot.lane.b32.xlu0 %v448, 12
      %v938 = vpop.permute.xlu0 %937
      %939 = vrot.lane.b32.xlu0 %v449, 12
      %v940 = vpop.permute.xlu0 %939
      %941 = vrot.lane.b32.xlu0 %v450, 12
      %v942 = vpop.permute.xlu0 %941
      %943 = vrot.lane.b32.xlu0 %v451, 12
      %v944 = vpop.permute.xlu0 %943
      %945 = vrot.lane.b32.xlu0 %v452, 12
      %v946 = vpop.permute.xlu0 %945
      %947 = vrot.lane.b32.xlu0 %v453, 12
      %v948 = vpop.permute.xlu0 %947
      %949 = vrot.lane.b32.xlu0 %v454, 12
      %v950 = vpop.permute.xlu0 %949
      %951 = vrot.lane.b32.xlu0 %v455, 12
      %v952 = vpop.permute.xlu0 %951
      %953 = vrot.lane.b32.xlu0 %v456, 12
      %v954 = vpop.permute.xlu0 %953
      %955 = vrot.lane.b32.xlu0 %v457, 12
      %v956 = vpop.permute.xlu0 %955
      %957 = vrot.lane.b32.xlu0 %v458, 12
      %v958 = vpop.permute.xlu0 %957
      %959 = vrot.lane.b32.xlu0 %v459, 12
      %v960 = vpop.permute.xlu0 %959
      %961 = vrot.lane.b32.xlu0 %v460, 12
      %v962 = vpop.permute.xlu0 %961
      %963 = vrot.lane.b32.xlu0 %v461, 12
      %v964 = vpop.permute.xlu0 %963
      %965 = vrot.lane.b32.xlu0 %v462, 12
      %v966 = vpop.permute.xlu0 %965
      %967 = vrot.lane.b32.xlu0 %v463, 12
      %v968 = vpop.permute.xlu0 %967
      %969 = vrot.lane.b32.xlu0 %v464, 12
      %v970 = vpop.permute.xlu0 %969
      %971 = vrot.lane.b32.xlu0 %v465, 12
      %v972 = vpop.permute.xlu0 %971
      %973 = vrot.lane.b32.xlu0 %v466, 12
      %v974 = vpop.permute.xlu0 %973
      %975 = vrot.lane.b32.xlu0 %v467, 12
      %v976 = vpop.permute.xlu0 %975
      %977 = vrot.lane.b32.xlu0 %v468, 12
      %v978 = vpop.permute.xlu0 %977
      %979 = vrot.lane.b32.xlu0 %v469, 12
      %v980 = vpop.permute.xlu0 %979
      %981 = vrot.lane.b32.xlu0 %v470, 12
      %v982 = vpop.permute.xlu0 %981
      %983 = vrot.lane.b32.xlu0 %v471, 12
      %v984 = vpop.permute.xlu0 %983
      %1049 = vrot.lane.b32.xlu0 %v472, 16
      %v1050 = vpop.permute.xlu0 %1049
      %1051 = vrot.lane.b32.xlu0 %v473, 16
      %v1052 = vpop.permute.xlu0 %1051
      %1053 = vrot.lane.b32.xlu0 %v474, 16
      %v1054 = vpop.permute.xlu0 %1053
      %1055 = vrot.lane.b32.xlu0 %v475, 16
      %v1056 = vpop.permute.xlu0 %1055
      %1057 = vrot.lane.b32.xlu0 %v476, 16
      %v1058 = vpop.permute.xlu0 %1057
      %1059 = vrot.lane.b32.xlu0 %v477, 16
      %v1060 = vpop.permute.xlu0 %1059
      %1061 = vrot.lane.b32.xlu0 %v478, 16
      %v1062 = vpop.permute.xlu0 %1061
      %1063 = vrot.lane.b32.xlu0 %v479, 16
      %v1064 = vpop.permute.xlu0 %1063
      %1065 = vrot.lane.b32.xlu0 %v480, 16
      %v1066 = vpop.permute.xlu0 %1065
      %1067 = vrot.lane.b32.xlu0 %v481, 16
      %v1068 = vpop.permute.xlu0 %1067
      %1069 = vrot.lane.b32.xlu0 %v482, 16
      %v1070 = vpop.permute.xlu0 %1069
      %1071 = vrot.lane.b32.xlu0 %v483, 16
      %v1072 = vpop.permute.xlu0 %1071
      %1073 = vrot.lane.b32.xlu0 %v484, 16
      %v1074 = vpop.permute.xlu0 %1073
      %1075 = vrot.lane.b32.xlu0 %v485, 16
      %v1076 = vpop.permute.xlu0 %1075
      %1077 = vrot.lane.b32.xlu0 %v486, 16
      %v1078 = vpop.permute.xlu0 %1077
      %1079 = vrot.lane.b32.xlu0 %v487, 16
      %v1080 = vpop.permute.xlu0 %1079
      %1081 = vrot.lane.b32.xlu0 %v488, 16
      %v1082 = vpop.permute.xlu0 %1081
      %1083 = vrot.lane.b32.xlu0 %v489, 16
      %v1084 = vpop.permute.xlu0 %1083
      %1085 = vrot.lane.b32.xlu0 %v490, 16
      %v1086 = vpop.permute.xlu0 %1085
      %1087 = vrot.lane.b32.xlu0 %v491, 16
      %v1088 = vpop.permute.xlu0 %1087
      %1089 = vrot.lane.b32.xlu0 %v492, 16
      %v1090 = vpop.permute.xlu0 %1089
      %1091 = vrot.lane.b32.xlu0 %v493, 16
      %v1092 = vpop.permute.xlu0 %1091
      %1093 = vrot.lane.b32.xlu0 %v494, 16
      %v1094 = vpop.permute.xlu0 %1093
      %1095 = vrot.lane.b32.xlu0 %v495, 16
      %v1096 = vpop.permute.xlu0 %1095
      %1097 = vrot.lane.b32.xlu0 %v496, 16
      %v1098 = vpop.permute.xlu0 %1097
      %1099 = vrot.lane.b32.xlu0 %v497, 16
      %v1100 = vpop.permute.xlu0 %1099
      %1101 = vrot.lane.b32.xlu0 %v498, 16
      %v1102 = vpop.permute.xlu0 %1101
      %1103 = vrot.lane.b32.xlu0 %v499, 16
      %v1104 = vpop.permute.xlu0 %1103
      %1105 = vrot.lane.b32.xlu0 %v500, 16
      %v1106 = vpop.permute.xlu0 %1105
      %1107 = vrot.lane.b32.xlu0 %v501, 16
      %v1108 = vpop.permute.xlu0 %1107
      %1109 = vrot.lane.b32.xlu0 %v502, 16
      %v1110 = vpop.permute.xlu0 %1109
      %1111 = vrot.lane.b32.xlu0 %v503, 16
      %v1112 = vpop.permute.xlu0 %1111
      %1177 = vrot.lane.b32.xlu0 %v504, 20
      %v1178 = vpop.permute.xlu0 %1177
      %1179 = vrot.lane.b32.xlu0 %v505, 20
      %v1180 = vpop.permute.xlu0 %1179
      %1181 = vrot.lane.b32.xlu0 %v506, 20
      %v1182 = vpop.permute.xlu0 %1181
      %1183 = vrot.lane.b32.xlu0 %v507, 20
      %v1184 = vpop.permute.xlu0 %1183
      %1185 = vrot.lane.b32.xlu0 %v508, 20
      %v1186 = vpop.permute.xlu0 %1185
      %1187 = vrot.lane.b32.xlu0 %v509, 20
      %v1188 = vpop.permute.xlu0 %1187
      %1189 = vrot.lane.b32.xlu0 %v510, 20
      %v1190 = vpop.permute.xlu0 %1189
      %1191 = vrot.lane.b32.xlu0 %v511, 20
      %v1192 = vpop.permute.xlu0 %1191
      %1193 = vrot.lane.b32.xlu0 %v512, 20
      %v1194 = vpop.permute.xlu0 %1193
      %1195 = vrot.lane.b32.xlu0 %v513, 20
      %v1196 = vpop.permute.xlu0 %1195
      %1197 = vrot.lane.b32.xlu0 %v514, 20
      %v1198 = vpop.permute.xlu0 %1197
      %1199 = vrot.lane.b32.xlu0 %v515, 20
      %v1200 = vpop.permute.xlu0 %1199
      %1201 = vrot.lane.b32.xlu0 %v516, 20
      %v1202 = vpop.permute.xlu0 %1201
      %1203 = vrot.lane.b32.xlu0 %v517, 20
      %v1204 = vpop.permute.xlu0 %1203
      %1205 = vrot.lane.b32.xlu0 %v518, 20
      %v1206 = vpop.permute.xlu0 %1205
      %1207 = vrot.lane.b32.xlu0 %v519, 20
      %v1208 = vpop.permute.xlu0 %1207
      %1209 = vrot.lane.b32.xlu0 %v520, 20
      %v1210 = vpop.permute.xlu0 %1209
      %1211 = vrot.lane.b32.xlu0 %v521, 20
      %v1212 = vpop.permute.xlu0 %1211
      %1213 = vrot.lane.b32.xlu0 %v522, 20
      %v1214 = vpop.permute.xlu0 %1213
      %1215 = vrot.lane.b32.xlu0 %v523, 20
      %v1216 = vpop.permute.xlu0 %1215
      %1217 = vrot.lane.b32.xlu0 %v524, 20
      %v1218 = vpop.permute.xlu0 %1217
      %1219 = vrot.lane.b32.xlu0 %v525, 20
      %v1220 = vpop.permute.xlu0 %1219
      %1221 = vrot.lane.b32.xlu0 %v526, 20
      %v1222 = vpop.permute.xlu0 %1221
      %1223 = vrot.lane.b32.xlu0 %v527, 20
      %v1224 = vpop.permute.xlu0 %1223
      %1225 = vrot.lane.b32.xlu0 %v528, 20
      %v1226 = vpop.permute.xlu0 %1225
      %1227 = vrot.lane.b32.xlu0 %v529, 20
      %v1228 = vpop.permute.xlu0 %1227
      %1229 = vrot.lane.b32.xlu0 %v530, 20
      %v1230 = vpop.permute.xlu0 %1229
      %1231 = vrot.lane.b32.xlu0 %v531, 20
      %v1232 = vpop.permute.xlu0 %1231
      %1233 = vrot.lane.b32.xlu0 %v532, 20
      %v1234 = vpop.permute.xlu0 %1233
      %1235 = vrot.lane.b32.xlu0 %v533, 20
      %v1236 = vpop.permute.xlu0 %1235
      %1237 = vrot.lane.b32.xlu0 %v534, 20
      %v1238 = vpop.permute.xlu0 %1237
      %1239 = vrot.lane.b32.xlu0 %v535, 20
      %v1240 = vpop.permute.xlu0 %1239
      %1305 = vrot.lane.b32.xlu0 %v537, 24
      %v1306 = vpop.permute.xlu0 %1305
      %1307 = vrot.lane.b32.xlu0 %v538, 24
      %v1308 = vpop.permute.xlu0 %1307
      %1309 = vrot.lane.b32.xlu0 %v539, 24
      %v1310 = vpop.permute.xlu0 %1309
      %1311 = vrot.lane.b32.xlu0 %v540, 24
      %v1312 = vpop.permute.xlu0 %1311
      %1313 = vrot.lane.b32.xlu0 %v541, 24
      %v1314 = vpop.permute.xlu0 %1313
      %1315 = vrot.lane.b32.xlu0 %v542, 24
      %v1316 = vpop.permute.xlu0 %1315
      %1317 = vrot.lane.b32.xlu0 %v543, 24
      %v1318 = vpop.permute.xlu0 %1317
      %1319 = vrot.lane.b32.xlu0 %v544, 24
      %v1320 = vpop.permute.xlu0 %1319
      %1321 = vrot.lane.b32.xlu0 %v545, 24
      %v1322 = vpop.permute.xlu0 %1321
      %1323 = vrot.lane.b32.xlu0 %v546, 24
      %v1324 = vpop.permute.xlu0 %1323
      %1325 = vrot.lane.b32.xlu0 %v547, 24
      %v1326 = vpop.permute.xlu0 %1325
      %1327 = vrot.lane.b32.xlu0 %v548, 24
      %v1328 = vpop.permute.xlu0 %1327
      %1329 = vrot.lane.b32.xlu0 %v549, 24
      %v1330 = vpop.permute.xlu0 %1329
      %1331 = vrot.lane.b32.xlu0 %v550, 24
      %v1332 = vpop.permute.xlu0 %1331
      %1333 = vrot.lane.b32.xlu0 %v551, 24
      %v1334 = vpop.permute.xlu0 %1333
      %1335 = vrot.lane.b32.xlu0 %v552, 24
      %v1336 = vpop.permute.xlu0 %1335
      %1337 = vrot.lane.b32.xlu0 %v553, 24
      %v1338 = vpop.permute.xlu0 %1337
      %1339 = vrot.lane.b32.xlu0 %v554, 24
      %v1340 = vpop.permute.xlu0 %1339
      %1341 = vrot.lane.b32.xlu0 %v555, 24
      %v1342 = vpop.permute.xlu0 %1341
      %1343 = vrot.lane.b32.xlu0 %v556, 24
      %v1344 = vpop.permute.xlu0 %1343
      %1345 = vrot.lane.b32.xlu0 %v557, 24
      %v1346 = vpop.permute.xlu0 %1345
      %1347 = vrot.lane.b32.xlu0 %v558, 24
      %v1348 = vpop.permute.xlu0 %1347
      %1349 = vrot.lane.b32.xlu0 %v559, 24
      %v1350 = vpop.permute.xlu0 %1349
      %1351 = vrot.lane.b32.xlu0 %v560, 24
      %v1352 = vpop.permute.xlu0 %1351
      %1353 = vrot.lane.b32.xlu0 %v561, 24
      %v1354 = vpop.permute.xlu0 %1353
      %1355 = vrot.lane.b32.xlu0 %v562, 24
      %v1356 = vpop.permute.xlu0 %1355
      %1357 = vrot.lane.b32.xlu0 %v563, 24
      %v1358 = vpop.permute.xlu0 %1357
      %1359 = vrot.lane.b32.xlu0 %v564, 24
      %v1360 = vpop.permute.xlu0 %1359
      %1361 = vrot.lane.b32.xlu0 %v565, 24
      %v1362 = vpop.permute.xlu0 %1361
      %1363 = vrot.lane.b32.xlu0 %v566, 24
      %v1364 = vpop.permute.xlu0 %1363
      %1365 = vrot.lane.b32.xlu0 %v567, 24
      %v1366 = vpop.permute.xlu0 %1365
      %1367 = vrot.lane.b32.xlu0 %v568, 24
      %v1368 = vpop.permute.xlu0 %1367
      %1433 = vrot.lane.b32.xlu0 %v569, 28
      %v1434 = vpop.permute.xlu0 %1433
      %1435 = vrot.lane.b32.xlu0 %v570, 28
      %v1436 = vpop.permute.xlu0 %1435
      %1437 = vrot.lane.b32.xlu0 %v571, 28
      %v1438 = vpop.permute.xlu0 %1437
      %1439 = vrot.lane.b32.xlu0 %v572, 28
      %v1440 = vpop.permute.xlu0 %1439
      %1441 = vrot.lane.b32.xlu0 %v573, 28
      %v1442 = vpop.permute.xlu0 %1441
      %1443 = vrot.lane.b32.xlu0 %v574, 28
      %v1444 = vpop.permute.xlu0 %1443
      %1445 = vrot.lane.b32.xlu0 %v575, 28
      %v1446 = vpop.permute.xlu0 %1445
      %1447 = vrot.lane.b32.xlu0 %v576, 28
      %v1448 = vpop.permute.xlu0 %1447
      %1449 = vrot.lane.b32.xlu0 %v577, 28
      %v1450 = vpop.permute.xlu0 %1449
      %1451 = vrot.lane.b32.xlu0 %v578, 28
      %v1452 = vpop.permute.xlu0 %1451
      %1453 = vrot.lane.b32.xlu0 %v579, 28
      %v1454 = vpop.permute.xlu0 %1453
      %1455 = vrot.lane.b32.xlu0 %v580, 28
      %v1456 = vpop.permute.xlu0 %1455
      %1457 = vrot.lane.b32.xlu0 %v581, 28
      %v1458 = vpop.permute.xlu0 %1457
      %1459 = vrot.lane.b32.xlu0 %v582, 28
      %v1460 = vpop.permute.xlu0 %1459
      %1461 = vrot.lane.b32.xlu0 %v583, 28
      %v1462 = vpop.permute.xlu0 %1461
      %1463 = vrot.lane.b32.xlu0 %v584, 28
      %v1464 = vpop.permute.xlu0 %1463
      %1465 = vrot.lane.b32.xlu0 %v585, 28
      %v1466 = vpop.permute.xlu0 %1465
      %1467 = vrot.lane.b32.xlu0 %v586, 28
      %v1468 = vpop.permute.xlu0 %1467
      %1469 = vrot.lane.b32.xlu0 %v587, 28
      %v1470 = vpop.permute.xlu0 %1469
      %1471 = vrot.lane.b32.xlu0 %v588, 28
      %v1472 = vpop.permute.xlu0 %1471
      %1473 = vrot.lane.b32.xlu0 %v589, 28
      %v1474 = vpop.permute.xlu0 %1473
      %1475 = vrot.lane.b32.xlu0 %v590, 28
      %v1476 = vpop.permute.xlu0 %1475
      %1477 = vrot.lane.b32.xlu0 %v591, 28
      %v1478 = vpop.permute.xlu0 %1477
      %1479 = vrot.lane.b32.xlu0 %v592, 28
      %v1480 = vpop.permute.xlu0 %1479
      %1481 = vrot.lane.b32.xlu0 %v593, 28
      %v1482 = vpop.permute.xlu0 %1481
      %1483 = vrot.lane.b32.xlu0 %v594, 28
      %v1484 = vpop.permute.xlu0 %1483
      %1485 = vrot.lane.b32.xlu0 %v595, 28
      %v1486 = vpop.permute.xlu0 %1485
      %1487 = vrot.lane.b32.xlu0 %v596, 28
      %v1488 = vpop.permute.xlu0 %1487
      %1489 = vrot.lane.b32.xlu0 %v597, 28
      %v1490 = vpop.permute.xlu0 %1489
      %1491 = vrot.lane.b32.xlu0 %v598, 28
      %v1492 = vpop.permute.xlu0 %1491
      %1493 = vrot.lane.b32.xlu0 %v599, 28
      %v1494 = vpop.permute.xlu0 %1493
      %1495 = vrot.lane.b32.xlu0 %v600, 28
      %v1496 = vpop.permute.xlu0 %1495
      %1561 = vrot.lane.b32.xlu0 %v601, 32
      %v1562 = vpop.permute.xlu0 %1561
      %1563 = vrot.lane.b32.xlu0 %v602, 32
      %v1564 = vpop.permute.xlu0 %1563
      %1565 = vrot.lane.b32.xlu0 %v603, 32
      %v1566 = vpop.permute.xlu0 %1565
      %1567 = vrot.lane.b32.xlu0 %v604, 32
      %v1568 = vpop.permute.xlu0 %1567
      %1569 = vrot.lane.b32.xlu0 %v605, 32
      %v1570 = vpop.permute.xlu0 %1569
      %1571 = vrot.lane.b32.xlu0 %v606, 32
      %v1572 = vpop.permute.xlu0 %1571
      %1573 = vrot.lane.b32.xlu0 %v607, 32
      %v1574 = vpop.permute.xlu0 %1573
      %1575 = vrot.lane.b32.xlu0 %v608, 32
      %v1576 = vpop.permute.xlu0 %1575
      %1577 = vrot.lane.b32.xlu0 %v609, 32
      %v1578 = vpop.permute.xlu0 %1577
      %1579 = vrot.lane.b32.xlu0 %v610, 32
      %v1580 = vpop.permute.xlu0 %1579
      %1581 = vrot.lane.b32.xlu0 %v611, 32
      %v1582 = vpop.permute.xlu0 %1581
      %1583 = vrot.lane.b32.xlu0 %v612, 32
      %v1584 = vpop.permute.xlu0 %1583
      %1585 = vrot.lane.b32.xlu0 %v613, 32
      %v1586 = vpop.permute.xlu0 %1585
      %1587 = vrot.lane.b32.xlu0 %v614, 32
      %v1588 = vpop.permute.xlu0 %1587
      %1589 = vrot.lane.b32.xlu0 %v615, 32
      %v1590 = vpop.permute.xlu0 %1589
      %1591 = vrot.lane.b32.xlu0 %v616, 32
      %v1592 = vpop.permute.xlu0 %1591
      %1593 = vrot.lane.b32.xlu0 %v617, 32
      %v1594 = vpop.permute.xlu0 %1593
      %1595 = vrot.lane.b32.xlu0 %v618, 32
      %v1596 = vpop.permute.xlu0 %1595
      %1597 = vrot.lane.b32.xlu0 %v619, 32
      %v1598 = vpop.permute.xlu0 %1597
      %1599 = vrot.lane.b32.xlu0 %v620, 32
      %v1600 = vpop.permute.xlu0 %1599
      %1601 = vrot.lane.b32.xlu0 %v621, 32
      %v1602 = vpop.permute.xlu0 %1601
      %1603 = vrot.lane.b32.xlu0 %v622, 32
      %v1604 = vpop.permute.xlu0 %1603
      %1605 = vrot.lane.b32.xlu0 %v623, 32
      %v1606 = vpop.permute.xlu0 %1605
      %1607 = vrot.lane.b32.xlu0 %v624, 32
      %v1608 = vpop.permute.xlu0 %1607
      %1609 = vrot.lane.b32.xlu0 %v625, 32
      %v1610 = vpop.permute.xlu0 %1609
      %1611 = vrot.lane.b32.xlu0 %v626, 32
      %v1612 = vpop.permute.xlu0 %1611
      %1613 = vrot.lane.b32.xlu0 %v627, 32
      %v1614 = vpop.permute.xlu0 %1613
      %1615 = vrot.lane.b32.xlu0 %v628, 32
      %v1616 = vpop.permute.xlu0 %1615
      %1617 = vrot.lane.b32.xlu0 %v629, 32
      %v1618 = vpop.permute.xlu0 %1617
      %1619 = vrot.lane.b32.xlu0 %v630, 32
      %v1620 = vpop.permute.xlu0 %1619
      %1621 = vrot.lane.b32.xlu0 %v631, 32
      %v1622 = vpop.permute.xlu0 %1621
      %1623 = vrot.lane.b32.xlu0 %v632, 32
      %v1624 = vpop.permute.xlu0 %1623
      %v1657 = vsel %vm223, %v344, %v666
      %v1658 = vsel %vm223, %v345, %v668
      %v1659 = vsel %vm223, %v346, %v670
      %v1660 = vsel %vm223, %v347, %v672
      %v1661 = vsel %vm223, %v348, %v674
      %v1662 = vsel %vm223, %v349, %v676
      %v1663 = vsel %vm223, %v350, %v678
      %v1664 = vsel %vm223, %v351, %v680
      %v1665 = vsel %vm223, %v352, %v682
      %v1666 = vsel %vm223, %v353, %v684
      %v1667 = vsel %vm223, %v354, %v686
      %v1668 = vsel %vm223, %v355, %v688
      %v1669 = vsel %vm223, %v356, %v690
      %v1670 = vsel %vm223, %v357, %v692
      %v1671 = vsel %vm223, %v358, %v694
      %v1672 = vsel %vm223, %v359, %v696
      %v1673 = vsel %vm223, %v360, %v698
      %v1674 = vsel %vm223, %v361, %v700
      %v1675 = vsel %vm223, %v362, %v702
      %v1676 = vsel %vm223, %v363, %v704
      %v1677 = vsel %vm223, %v364, %v706
      %v1678 = vsel %vm223, %v365, %v708
      %v1679 = vsel %vm223, %v366, %v710
      %v1680 = vsel %vm223, %v367, %v712
      %v1681 = vsel %vm223, %v368, %v714
      %v1682 = vsel %vm223, %v369, %v716
      %v1683 = vsel %vm223, %v370, %v718
      %v1684 = vsel %vm223, %v371, %v720
      %v1685 = vsel %vm223, %v372, %v722
      %v1686 = vsel %vm223, %v373, %v724
      %v1687 = vsel %vm223, %v374, %v726
      %v1688 = vsel %vm223, %v375, %v728
      %vm1689 = vcmask 64512
      %v1690 = vsel %vm1689, %v1657, %v794
      %v1691 = vsel %vm1689, %v1658, %v796
      %v1692 = vsel %vm1689, %v1659, %v798
      %v1693 = vsel %vm1689, %v1660, %v800
      %v1694 = vsel %vm1689, %v1661, %v802
      %v1695 = vsel %vm1689, %v1662, %v804
      %v1696 = vsel %vm1689, %v1663, %v806
      %v1697 = vsel %vm1689, %v1664, %v808
      %v1698 = vsel %vm1689, %v1665, %v810
      %v1699 = vsel %vm1689, %v1666, %v812
      %v1700 = vsel %vm1689, %v1667, %v814
      %v1701 = vsel %vm1689, %v1668, %v816
      %v1702 = vsel %vm1689, %v1669, %v818
      %v1703 = vsel %vm1689, %v1670, %v820
      %v1704 = vsel %vm1689, %v1671, %v822
      %v1705 = vsel %vm1689, %v1672, %v824
      %v1706 = vsel %vm1689, %v1673, %v826
      %v1707 = vsel %vm1689, %v1674, %v828
      %v1708 = vsel %vm1689, %v1675, %v830
      %v1709 = vsel %vm1689, %v1676, %v832
      %v1710 = vsel %vm1689, %v1677, %v834
      %v1711 = vsel %vm1689, %v1678, %v836
      %v1712 = vsel %vm1689, %v1679, %v838
      %v1713 = vsel %vm1689, %v1680, %v840
      %v1714 = vsel %vm1689, %v1681, %v842
      %v1715 = vsel %vm1689, %v1682, %v844
      %v1716 = vsel %vm1689, %v1683, %v846
      %v1717 = vsel %vm1689, %v1684, %v848
      %v1718 = vsel %vm1689, %v1685, %v850
      %v1719 = vsel %vm1689, %v1686, %v852
      %v1720 = vsel %vm1689, %v1687, %v854
      %v1721 = vsel %vm1689, %v1688, %v856
      %vm1722 = vcmask 97280
      %v1723 = vsel %vm1722, %v1690, %v922
      %v1724 = vsel %vm1722, %v1691, %v924
      %v1725 = vsel %vm1722, %v1692, %v926
      %v1726 = vsel %vm1722, %v1693, %v928
      %v1727 = vsel %vm1722, %v1694, %v930
      %v1728 = vsel %vm1722, %v1695, %v932
      %v1729 = vsel %vm1722, %v1696, %v934
      %v1730 = vsel %vm1722, %v1697, %v936
      %v1731 = vsel %vm1722, %v1698, %v938
      %v1732 = vsel %vm1722, %v1699, %v940
      %v1733 = vsel %vm1722, %v1700, %v942
      %v1734 = vsel %vm1722, %v1701, %v944
      %v1735 = vsel %vm1722, %v1702, %v946
      %v1736 = vsel %vm1722, %v1703, %v948
      %v1737 = vsel %vm1722, %v1704, %v950
      %v1738 = vsel %vm1722, %v1705, %v952
      %v1739 = vsel %vm1722, %v1706, %v954
      %v1740 = vsel %vm1722, %v1707, %v956
      %v1741 = vsel %vm1722, %v1708, %v958
      %v1742 = vsel %vm1722, %v1709, %v960
      %v1743 = vsel %vm1722, %v1710, %v962
      %v1744 = vsel %vm1722, %v1711, %v964
      %v1745 = vsel %vm1722, %v1712, %v966
      %v1746 = vsel %vm1722, %v1713, %v968
      %v1747 = vsel %vm1722, %v1714, %v970
      %v1748 = vsel %vm1722, %v1715, %v972
      %v1749 = vsel %vm1722, %v1716, %v974
      %v1750 = vsel %vm1722, %v1717, %v976
      %v1751 = vsel %vm1722, %v1718, %v978
      %v1752 = vsel %vm1722, %v1719, %v980
      %v1753 = vsel %vm1722, %v1720, %v982
      %v1754 = vsel %vm1722, %v1721, %v984
      %vm1755 = vcmask 130048
      %v1756 = vsel %vm1755, %v1723, %v1050
      %v1757 = vsel %vm1755, %v1724, %v1052
      %v1758 = vsel %vm1755, %v1725, %v1054
      %v1759 = vsel %vm1755, %v1726, %v1056
      %v1760 = vsel %vm1755, %v1727, %v1058
      %v1761 = vsel %vm1755, %v1728, %v1060
      %v1762 = vsel %vm1755, %v1729, %v1062
      %v1763 = vsel %vm1755, %v1730, %v1064
      %v1764 = vsel %vm1755, %v1731, %v1066
      %v1765 = vsel %vm1755, %v1732, %v1068
      %v1766 = vsel %vm1755, %v1733, %v1070
      %v1767 = vsel %vm1755, %v1734, %v1072
      %v1768 = vsel %vm1755, %v1735, %v1074
      %v1769 = vsel %vm1755, %v1736, %v1076
      %v1770 = vsel %vm1755, %v1737, %v1078
      %v1771 = vsel %vm1755, %v1738, %v1080
      %v1772 = vsel %vm1755, %v1739, %v1082
      %v1773 = vsel %vm1755, %v1740, %v1084
      %v1774 = vsel %vm1755, %v1741, %v1086
      %v1775 = vsel %vm1755, %v1742, %v1088
      %v1776 = vsel %vm1755, %v1743, %v1090
      %v1777 = vsel %vm1755, %v1744, %v1092
      %v1778 = vsel %vm1755, %v1745, %v1094
      %v1779 = vsel %vm1755, %v1746, %v1096
      %v1780 = vsel %vm1755, %v1747, %v1098
      %v1781 = vsel %vm1755, %v1748, %v1100
      %v1782 = vsel %vm1755, %v1749, %v1102
      %v1783 = vsel %vm1755, %v1750, %v1104
      %v1784 = vsel %vm1755, %v1751, %v1106
      %v1785 = vsel %vm1755, %v1752, %v1108
      %v1786 = vsel %vm1755, %v1753, %v1110
      %v1787 = vsel %vm1755, %v1754, %v1112
      %vm1788 = vcmask 162816
      %v1789 = vsel %vm1788, %v1756, %v1178
      %v1790 = vsel %vm1788, %v1757, %v1180
      %v1791 = vsel %vm1788, %v1758, %v1182
      %v1792 = vsel %vm1788, %v1759, %v1184
      %v1793 = vsel %vm1788, %v1760, %v1186
      %v1794 = vsel %vm1788, %v1761, %v1188
      %v1795 = vsel %vm1788, %v1762, %v1190
      %v1796 = vsel %vm1788, %v1763, %v1192
      %v1797 = vsel %vm1788, %v1764, %v1194
      %v1798 = vsel %vm1788, %v1765, %v1196
      %v1799 = vsel %vm1788, %v1766, %v1198
      %v1800 = vsel %vm1788, %v1767, %v1200
      %v1801 = vsel %vm1788, %v1768, %v1202
      %v1802 = vsel %vm1788, %v1769, %v1204
      %v1803 = vsel %vm1788, %v1770, %v1206
      %v1804 = vsel %vm1788, %v1771, %v1208
      %v1805 = vsel %vm1788, %v1772, %v1210
      %v1806 = vsel %vm1788, %v1773, %v1212
      %v1807 = vsel %vm1788, %v1774, %v1214
      %v1808 = vsel %vm1788, %v1775, %v1216
      %v1809 = vsel %vm1788, %v1776, %v1218
      %v1810 = vsel %vm1788, %v1777, %v1220
      %v1811 = vsel %vm1788, %v1778, %v1222
      %v1812 = vsel %vm1788, %v1779, %v1224
      %v1813 = vsel %vm1788, %v1780, %v1226
      %v1814 = vsel %vm1788, %v1781, %v1228
      %v1815 = vsel %vm1788, %v1782, %v1230
      %v1816 = vsel %vm1788, %v1783, %v1232
      %v1817 = vsel %vm1788, %v1784, %v1234
      %v1818 = vsel %vm1788, %v1785, %v1236
      %v1819 = vsel %vm1788, %v1786, %v1238
      %v1820 = vsel %vm1788, %v1787, %v1240
      %vm1821 = vcmask 195584
      %v1822 = vsel %vm1821, %v1789, %v1306
      %v1823 = vsel %vm1821, %v1790, %v1308
      %v1824 = vsel %vm1821, %v1791, %v1310
      %v1825 = vsel %vm1821, %v1792, %v1312
      %v1826 = vsel %vm1821, %v1793, %v1314
      %v1827 = vsel %vm1821, %v1794, %v1316
      %v1828 = vsel %vm1821, %v1795, %v1318
      %v1829 = vsel %vm1821, %v1796, %v1320
      %v1830 = vsel %vm1821, %v1797, %v1322
      %v1831 = vsel %vm1821, %v1798, %v1324
      %v1832 = vsel %vm1821, %v1799, %v1326
      %v1833 = vsel %vm1821, %v1800, %v1328
      %v1834 = vsel %vm1821, %v1801, %v1330
      %v1835 = vsel %vm1821, %v1802, %v1332
      %v1836 = vsel %vm1821, %v1803, %v1334
      %v1837 = vsel %vm1821, %v1804, %v1336
      %v1838 = vsel %vm1821, %v1805, %v1338
      %v1839 = vsel %vm1821, %v1806, %v1340
      %v1840 = vsel %vm1821, %v1807, %v1342
      %v1841 = vsel %vm1821, %v1808, %v1344
      %v1842 = vsel %vm1821, %v1809, %v1346
      %v1843 = vsel %vm1821, %v1810, %v1348
      %v1844 = vsel %vm1821, %v1811, %v1350
      %v1845 = vsel %vm1821, %v1812, %v1352
      %v1846 = vsel %vm1821, %v1813, %v1354
      %v1847 = vsel %vm1821, %v1814, %v1356
      %v1848 = vsel %vm1821, %v1815, %v1358
      %v1849 = vsel %vm1821, %v1816, %v1360
      %v1850 = vsel %vm1821, %v1817, %v1362
      %v1851 = vsel %vm1821, %v1818, %v1364
      %v1852 = vsel %vm1821, %v1819, %v1366
      %v1853 = vsel %vm1821, %v1820, %v1368
      %vm1854 = vcmask 228352
      %v1855 = vsel %vm1854, %v1822, %v1434
      %v1856 = vsel %vm1854, %v1823, %v1436
      %v1857 = vsel %vm1854, %v1824, %v1438
      %v1858 = vsel %vm1854, %v1825, %v1440
      %v1859 = vsel %vm1854, %v1826, %v1442
      %v1860 = vsel %vm1854, %v1827, %v1444
      %v1861 = vsel %vm1854, %v1828, %v1446
      %v1862 = vsel %vm1854, %v1829, %v1448
      %v1863 = vsel %vm1854, %v1830, %v1450
      %v1864 = vsel %vm1854, %v1831, %v1452
      %v1865 = vsel %vm1854, %v1832, %v1454
      %v1866 = vsel %vm1854, %v1833, %v1456
      %v1867 = vsel %vm1854, %v1834, %v1458
      %v1868 = vsel %vm1854, %v1835, %v1460
      %v1869 = vsel %vm1854, %v1836, %v1462
      %v1870 = vsel %vm1854, %v1837, %v1464
      %v1871 = vsel %vm1854, %v1838, %v1466
      %v1872 = vsel %vm1854, %v1839, %v1468
      %v1873 = vsel %vm1854, %v1840, %v1470
      %v1874 = vsel %vm1854, %v1841, %v1472
      %v1875 = vsel %vm1854, %v1842, %v1474
      %v1876 = vsel %vm1854, %v1843, %v1476
      %v1877 = vsel %vm1854, %v1844, %v1478
      %v1878 = vsel %vm1854, %v1845, %v1480
      %v1879 = vsel %vm1854, %v1846, %v1482
      %v1880 = vsel %vm1854, %v1847, %v1484
      %v1881 = vsel %vm1854, %v1848, %v1486
      %v1882 = vsel %vm1854, %v1849, %v1488
      %v1883 = vsel %vm1854, %v1850, %v1490
      %v1884 = vsel %vm1854, %v1851, %v1492
      %v1885 = vsel %vm1854, %v1852, %v1494
      %v1886 = vsel %vm1854, %v1853, %v1496
      %vm1887 = vcmask 261120
      %v1888 = vsel %vm1887, %v1855, %v1562
      %v1889 = vsel %vm1887, %v1856, %v1564
      %v1890 = vsel %vm1887, %v1857, %v1566
      %v1891 = vsel %vm1887, %v1858, %v1568
      %v1892 = vsel %vm1887, %v1859, %v1570
      %v1893 = vsel %vm1887, %v1860, %v1572
      %v1894 = vsel %vm1887, %v1861, %v1574
      %v1895 = vsel %vm1887, %v1862, %v1576
      %v1896 = vsel %vm1887, %v1863, %v1578
      %v1897 = vsel %vm1887, %v1864, %v1580
      %v1898 = vsel %vm1887, %v1865, %v1582
      %v1899 = vsel %vm1887, %v1866, %v1584
      %v1900 = vsel %vm1887, %v1867, %v1586
      %v1901 = vsel %vm1887, %v1868, %v1588
      %v1902 = vsel %vm1887, %v1869, %v1590
      %v1903 = vsel %vm1887, %v1870, %v1592
      %v1904 = vsel %vm1887, %v1871, %v1594
      %v1905 = vsel %vm1887, %v1872, %v1596
      %v1906 = vsel %vm1887, %v1873, %v1598
      %v1907 = vsel %vm1887, %v1874, %v1600
      %v1908 = vsel %vm1887, %v1875, %v1602
      %v1909 = vsel %vm1887, %v1876, %v1604
      %v1910 = vsel %vm1887, %v1877, %v1606
      %v1911 = vsel %vm1887, %v1878, %v1608
      %v1912 = vsel %vm1887, %v1879, %v1610
      %v1913 = vsel %vm1887, %v1880, %v1612
      %v1914 = vsel %vm1887, %v1881, %v1614
      %v1915 = vsel %vm1887, %v1882, %v1616
      %v1916 = vsel %vm1887, %v1883, %v1618
      %v1917 = vsel %vm1887, %v1884, %v1620
      %v1918 = vsel %vm1887, %v1885, %v1622
      %v1919 = vsel %vm1887, %v1886, %v1624
      %v1920 = vpack.c.bf16 %v1889, %v1888
      %v1921 = vpack.c.bf16 %v1891, %v1890
      %v1922 = vpack.c.bf16 %v1893, %v1892
      %v1923 = vpack.c.bf16 %v1895, %v1894
      %v1924 = vpack.c.bf16 %v1897, %v1896
      %v1925 = vpack.c.bf16 %v1899, %v1898
      %v1926 = vpack.c.bf16 %v1901, %v1900
      %v1927 = vpack.c.bf16 %v1903, %v1902
      %v1928 = vpack.c.bf16 %v1905, %v1904
      %v1929 = vpack.c.bf16 %v1907, %v1906
      %v1930 = vpack.c.bf16 %v1909, %v1908
      %v1931 = vpack.c.bf16 %v1911, %v1910
      %v1932 = vpack.c.bf16 %v1913, %v1912
      %v1933 = vpack.c.bf16 %v1915, %v1914
      %v1934 = vpack.c.bf16 %v1917, %v1916
      %v1935 = vpack.c.bf16 %v1919, %v1918
      %v1936 = vld [vmem:[%s210] sm:$0xf]
      %v1937 = vld [vmem:[%s210 + $0x4] sm:$0xf]
      %v1938 = vld [vmem:[%s210 + $0x8] sm:$0xf]
      %v1939 = vld [vmem:[%s210 + $0xc] sm:$0xf]
      %v1940 = vld [vmem:[%s210 + $0x10] sm:$0x3]
      %v1941 = vld [vmem:[%s213] sm:$0x1]
      %v1943 = vlaneseq
      %v1944 = vshrl.u32 %v1943, 7
      %v1945 = vsub.s32 0, %v1944
      %v1946 = vrot.slane %v1941, %v1945
      %v1953 = vunpack.c.l.b16 %v1936
      %v1954 = vunpack.c.l.b16 %v1937
      %v1955 = vunpack.c.l.b16 %v1938
      %v1956 = vunpack.c.l.b16 %v1939
      %v1957 = vunpack.c.l.b16 %v1940
      %v1958 = vpack.c.b16 %v1954, %v1953
      %v1959 = vpack.c.b16 %v1956, %v1955
      %v1960 = vpack.c.b16 %v1957, %v1957
      %vm1963 = vcmask 293888
      %v1965 = vsel %vm1963, %v1920, 0
      %v1968 = vsel %vm1963, %v1921, 0
      %v1971 = vsel %vm1963, %v1922, 0
      %v1974 = vsel %vm1963, %v1923, 0
      %v1977 = vsel %vm1963, %v1924, 0
      %v1980 = vsel %vm1963, %v1925, 0
      %v1983 = vsel %vm1963, %v1926, 0
      %v1986 = vsel %vm1963, %v1927, 0
      %v1989 = vsel %vm1963, %v1928, 0
      %v1992 = vsel %vm1963, %v1929, 0
      %v1995 = vsel %vm1963, %v1930, 0
      %v1998 = vsel %vm1963, %v1931, 0
      %v2001 = vsel %vm1963, %v1932, 0
      %v2004 = vsel %vm1963, %v1933, 0
      %v2007 = vsel %vm1963, %v1934, 0
      %v2010 = vsel %vm1963, %v1935, 0
      %vm2012 = vcmask 1041408
      %v2014 = vsel %vm2012, %v1960, 0
      %2016 = vmatprep.subr.bf16.mxu0 0
      %2017 = vmatpush1.bf16.msra.mxu0 %v1958
      %2018 = vmatprep.subr.bf16.mxu0 0
      %2019 = vmatpush1.bf16.msra.mxu0 %v1959
      %2020 = vmatprep.subr.bf16.mxu0 0
      %2021 = vmatpush1.bf16.msra.mxu0 %v2014
      %2022 = vmatprep.subr.bf16.mxu0 0
      %2023 = vmatpush1.bf16.msra.mxu0 0
      %2024 = vmatprep.subr.bf16.mxu0 0
      %2025 = vmatpush1.bf16.msra.mxu0 0
      %2026 = vmatprep.subr.bf16.mxu0 0
      %2027 = vmatpush1.bf16.msra.mxu0 0
      %2028 = vmatprep.subr.bf16.mxu0 0
      %2029 = vmatpush1.bf16.msra.mxu0 0
      %2030 = vmatprep.subr.bf16.mxu0 0
      %2031 = vmatpush1.bf16.msra.mxu0 0
      %2032 = vmatprep.subr.bf16.mxu0 0
      %2033 = vmatpush1.bf16.msra.mxu0 0
      %2034 = vmatprep.subr.bf16.mxu0 0
      %2035 = vmatpush1.bf16.msra.mxu0 0
      %2036 = vmatprep.subr.bf16.mxu0 0
      %2037 = vmatpush1.bf16.msra.mxu0 0
      %2038 = vmatprep.subr.bf16.mxu0 0
      %2039 = vmatpush1.bf16.msra.mxu0 0
      %2040 = vmatprep.subr.bf16.mxu0 0
      %2041 = vmatpush1.bf16.msra.mxu0 0
      %2042 = vmatprep.subr.bf16.mxu0 0
      %2043 = vmatpush1.bf16.msra.mxu0 0
      %2044 = vmatprep.subr.bf16.mxu0 0
      %2045 = vmatpush1.bf16.msra.mxu0 0
      %2046 = vmatprep.subr.bf16.mxu0 0
      %2047 = vmatpush1.bf16.msra.mxu0 0
      %2048 = vmatprep.mubr.bf16.mxu0 0
      %2049 = vmatmul.mubr.bf16.gmra.mrb[0].mxu0 %v1965
      %v2050 = vpop.f32.mrb[0].mxu0
      %v2051 = vadd.f32 %v1946, %v2050
      %v2052 = vpop.f32.mrb[0].mxu0
      %v2053 = vpop.f32.mrb[0].mxu0
      %v2054 = vadd.f32 %v1946, %v2053
      %v2055 = vpop.f32.mrb[0].mxu0
      %2056 = vmatprep.mubr.bf16.mxu0 0
      %2057 = vmatmul.mubr.bf16.gmra.mrb[0].mxu0 %v1968
      %v2058 = vpop.f32.mrb[0].mxu0
      %v2059 = vadd.f32 %v1946, %v2058
      %v2060 = vpop.f32.mrb[0].mxu0
      %v2061 = vpop.f32.mrb[0].mxu0
      %v2062 = vadd.f32 %v1946, %v2061
      %v2063 = vpop.f32.mrb[0].mxu0
      %2064 = vmatprep.mubr.bf16.mxu0 0
      %2065 = vmatmul.mubr.bf16.gmra.mrb[0].mxu0 %v1971
      %v2066 = vpop.f32.mrb[0].mxu0
      %v2067 = vadd.f32 %v1946, %v2066
      %v2068 = vpop.f32.mrb[0].mxu0
      %v2069 = vpop.f32.mrb[0].mxu0
      %v2070 = vadd.f32 %v1946, %v2069
      %v2071 = vpop.f32.mrb[0].mxu0
      %2072 = vmatprep.mubr.bf16.mxu0 0
      %2073 = vmatmul.mubr.bf16.gmra.mrb[0].mxu0 %v1974
      %v2074 = vpop.f32.mrb[0].mxu0
      %v2075 = vadd.f32 %v1946, %v2074
      %v2076 = vpop.f32.mrb[0].mxu0
      %v2077 = vpop.f32.mrb[0].mxu0
      %v2078 = vadd.f32 %v1946, %v2077
      %v2079 = vpop.f32.mrb[0].mxu0
      %2080 = vmatprep.mubr.bf16.mxu0 0
      %2081 = vmatmul.mubr.bf16.gmra.mrb[0].mxu0 %v1977
      %v2082 = vpop.f32.mrb[0].mxu0
      %v2083 = vadd.f32 %v1946, %v2082
      %v2084 = vpop.f32.mrb[0].mxu0
      %v2085 = vpop.f32.mrb[0].mxu0
      %v2086 = vadd.f32 %v1946, %v2085
      %v2087 = vpop.f32.mrb[0].mxu0
      %2088 = vmatprep.mubr.bf16.mxu0 0
      %2089 = vmatmul.mubr.bf16.gmra.mrb[0].mxu0 %v1980
      %v2090 = vpop.f32.mrb[0].mxu0
      %v2091 = vadd.f32 %v1946, %v2090
      %v2092 = vpop.f32.mrb[0].mxu0
      %v2093 = vpop.f32.mrb[0].mxu0
      %v2094 = vadd.f32 %v1946, %v2093
      %v2095 = vpop.f32.mrb[0].mxu0
      %2096 = vmatprep.mubr.bf16.mxu0 0
      %2097 = vmatmul.mubr.bf16.gmra.mrb[0].mxu0 %v1983
      %v2098 = vpop.f32.mrb[0].mxu0
      %v2099 = vadd.f32 %v1946, %v2098
      %v2100 = vpop.f32.mrb[0].mxu0
      %v2101 = vpop.f32.mrb[0].mxu0
      %v2102 = vadd.f32 %v1946, %v2101
      %v2103 = vpop.f32.mrb[0].mxu0
      %2104 = vmatprep.mubr.bf16.mxu0 0
      %2105 = vmatmul.mubr.bf16.gmra.mrb[0].mxu0 %v1986
      %v2106 = vpop.f32.mrb[0].mxu0
      %v2107 = vadd.f32 %v1946, %v2106
      %v2108 = vpop.f32.mrb[0].mxu0
      %v2109 = vpop.f32.mrb[0].mxu0
      %v2110 = vadd.f32 %v1946, %v2109
      %v2111 = vpop.f32.mrb[0].mxu0
      %2112 = vmatprep.mubr.bf16.mxu0 0
      %2113 = vmatmul.mubr.bf16.gmra.mrb[0].mxu0 %v1989
      %v2114 = vpop.f32.mrb[0].mxu0
      %v2115 = vadd.f32 %v1946, %v2114
      %v2116 = vpop.f32.mrb[0].mxu0
      %v2117 = vpop.f32.mrb[0].mxu0
      %v2118 = vadd.f32 %v1946, %v2117
      %v2119 = vpop.f32.mrb[0].mxu0
      %2120 = vmatprep.mubr.bf16.mxu0 0
      %2121 = vmatmul.mubr.bf16.gmra.mrb[0].mxu0 %v1992
      %v2122 = vpop.f32.mrb[0].mxu0
      %v2123 = vadd.f32 %v1946, %v2122
      %v2124 = vpop.f32.mrb[0].mxu0
      %v2125 = vpop.f32.mrb[0].mxu0
      %v2126 = vadd.f32 %v1946, %v2125
      %v2127 = vpop.f32.mrb[0].mxu0
      %2128 = vmatprep.mubr.bf16.mxu0 0
      %2129 = vmatmul.mubr.bf16.gmra.mrb[0].mxu0 %v1995
      %v2130 = vpop.f32.mrb[0].mxu0
      %v2131 = vadd.f32 %v1946, %v2130
      %v2132 = vpop.f32.mrb[0].mxu0
      %v2133 = vpop.f32.mrb[0].mxu0
      %v2134 = vadd.f32 %v1946, %v2133
      %v2135 = vpop.f32.mrb[0].mxu0
      %2136 = vmatprep.mubr.bf16.mxu0 0
      %2137 = vmatmul.mubr.bf16.gmra.mrb[0].mxu0 %v1998
      %v2138 = vpop.f32.mrb[0].mxu0
      %v2139 = vadd.f32 %v1946, %v2138
      %v2140 = vpop.f32.mrb[0].mxu0
      %v2141 = vpop.f32.mrb[0].mxu0
      %v2142 = vadd.f32 %v1946, %v2141
      %v2143 = vpop.f32.mrb[0].mxu0
      %2144 = vmatprep.mubr.bf16.mxu0 0
      %2145 = vmatmul.mubr.bf16.gmra.mrb[0].mxu0 %v2001
      %v2146 = vpop.f32.mrb[0].mxu0
      %v2147 = vadd.f32 %v1946, %v2146
      %v2148 = vpop.f32.mrb[0].mxu0
      %v2149 = vpop.f32.mrb[0].mxu0
      %v2150 = vadd.f32 %v1946, %v2149
      %v2151 = vpop.f32.mrb[0].mxu0
      %2152 = vmatprep.mubr.bf16.mxu0 0
      %2153 = vmatmul.mubr.bf16.gmra.mrb[0].mxu0 %v2004
      %v2154 = vpop.f32.mrb[0].mxu0
      %v2155 = vadd.f32 %v1946, %v2154
      %v2156 = vpop.f32.mrb[0].mxu0
      %v2157 = vpop.f32.mrb[0].mxu0
      %v2158 = vadd.f32 %v1946, %v2157
      %v2159 = vpop.f32.mrb[0].mxu0
      %2160 = vmatprep.mubr.bf16.mxu0 0
      %2161 = vmatmul.mubr.bf16.gmra.mrb[0].mxu0 %v2007
      %v2162 = vpop.f32.mrb[0].mxu0
      %v2163 = vadd.f32 %v1946, %v2162
      %v2164 = vpop.f32.mrb[0].mxu0
      %v2165 = vpop.f32.mrb[0].mxu0
      %v2166 = vadd.f32 %v1946, %v2165
      %v2167 = vpop.f32.mrb[0].mxu0
      %2168 = vmatprep.mubr.bf16.mxu0 0
      %2169 = vmatmul.mubr.bf16.gmra.mrb[0].mxu0 %v2010
      %v2170 = vpop.f32.mrb[0].mxu0
      %v2171 = vadd.f32 %v1946, %v2170
      %v2172 = vpop.f32.mrb[0].mxu0
      %v2173 = vpop.f32.mrb[0].mxu0
      %v2174 = vadd.f32 %v1946, %v2173
      %v2175 = vpop.f32.mrb[0].mxu0
      %2176 = vdwg.mxu0
      %v2177 = vmax.f32 %v2051, 0.0
      %v2178 = vmax.f32 %v2054, 0.0
      %v2179 = vmax.f32 %v2059, 0.0
      %v2180 = vmax.f32 %v2062, 0.0
      %v2181 = vmax.f32 %v2067, 0.0
      %v2182 = vmax.f32 %v2070, 0.0
      %v2183 = vmax.f32 %v2075, 0.0
      %v2184 = vmax.f32 %v2078, 0.0
      %v2185 = vmax.f32 %v2083, 0.0
      %v2186 = vmax.f32 %v2086, 0.0
      %v2187 = vmax.f32 %v2091, 0.0
      %v2188 = vmax.f32 %v2094, 0.0
      %v2189 = vmax.f32 %v2099, 0.0
      %v2190 = vmax.f32 %v2102, 0.0
      %v2191 = vmax.f32 %v2107, 0.0
      %v2192 = vmax.f32 %v2110, 0.0
      %v2193 = vmax.f32 %v2115, 0.0
      %v2194 = vmax.f32 %v2118, 0.0
      %v2195 = vmax.f32 %v2123, 0.0
      %v2196 = vmax.f32 %v2126, 0.0
      %v2197 = vmax.f32 %v2131, 0.0
      %v2198 = vmax.f32 %v2134, 0.0
      %v2199 = vmax.f32 %v2139, 0.0
      %v2200 = vmax.f32 %v2142, 0.0
      %v2201 = vmax.f32 %v2147, 0.0
      %v2202 = vmax.f32 %v2150, 0.0
      %v2203 = vmax.f32 %v2155, 0.0
      %v2204 = vmax.f32 %v2158, 0.0
      %v2205 = vmax.f32 %v2163, 0.0
      %v2206 = vmax.f32 %v2166, 0.0
      %v2207 = vmax.f32 %v2171, 0.0
      %v2208 = vmax.f32 %v2174, 0.0
      %2209 = vst.msk [vmem:[%s221] sm:$0xff] %vm1689, %v2177
      %2210 = vst.msk [vmem:[%s221 + $0x8] sm:$0xff] %vm1689, %v2178
      %2211 = vst.msk [vmem:[%s221 + $0x10] sm:$0xff] %vm1689, %v2179
      %2212 = vst.msk [vmem:[%s221 + $0x18] sm:$0xff] %vm1689, %v2180
      %2213 = vst.msk [vmem:[%s221 + $0x20] sm:$0xff] %vm1689, %v2181
      %2214 = vst.msk [vmem:[%s221 + $0x28] sm:$0xff] %vm1689, %v2182
      %2215 = vst.msk [vmem:[%s221 + $0x30] sm:$0xff] %vm1689, %v2183
      %2216 = vst.msk [vmem:[%s221 + $0x38] sm:$0xff] %vm1689, %v2184
      %2217 = vst.msk [vmem:[%s221 + $0x40] sm:$0xff] %vm1689, %v2185
      %2218 = vst.msk [vmem:[%s221 + $0x48] sm:$0xff] %vm1689, %v2186
      %2219 = vst.msk [vmem:[%s221 + $0x50] sm:$0xff] %vm1689, %v2187
      %2220 = vst.msk [vmem:[%s221 + $0x58] sm:$0xff] %vm1689, %v2188
      %2221 = vst.msk [vmem:[%s221 + $0x60] sm:$0xff] %vm1689, %v2189
      %2222 = vst.msk [vmem:[%s221 + $0x68] sm:$0xff] %vm1689, %v2190
      %2223 = vst.msk [vmem:[%s221 + $0x70] sm:$0xff] %vm1689, %v2191
      %2224 = vst.msk [vmem:[%s221 + $0x78] sm:$0xff] %vm1689, %v2192
      %2225 = vst.msk [vmem:[%s221 + $0x80] sm:$0xff] %vm1689, %v2193
      %2226 = vst.msk [vmem:[%s221 + $0x88] sm:$0xff] %vm1689, %v2194
      %2227 = vst.msk [vmem:[%s221 + $0x90] sm:$0xff] %vm1689, %v2195
      %2228 = vst.msk [vmem:[%s221 + $0x98] sm:$0xff] %vm1689, %v2196
      %2229 = vst.msk [vmem:[%s221 + $0xa0] sm:$0xff] %vm1689, %v2197
      %2230 = vst.msk [vmem:[%s221 + $0xa8] sm:$0xff] %vm1689, %v2198
      %2231 = vst.msk [vmem:[%s221 + $0xb0] sm:$0xff] %vm1689, %v2199
      %2232 = vst.msk [vmem:[%s221 + $0xb8] sm:$0xff] %vm1689, %v2200
      %2233 = vst.msk [vmem:[%s221 + $0xc0] sm:$0xff] %vm1689, %v2201
      %2234 = vst.msk [vmem:[%s221 + $0xc8] sm:$0xff] %vm1689, %v2202
      %2235 = vst.msk [vmem:[%s221 + $0xd0] sm:$0xff] %vm1689, %v2203
      %2236 = vst.msk [vmem:[%s221 + $0xd8] sm:$0xff] %vm1689, %v2204
      %2237 = vst.msk [vmem:[%s221 + $0xe0] sm:$0xff] %vm1689, %v2205
      %2238 = vst.msk [vmem:[%s221 + $0xe8] sm:$0xff] %vm1689, %v2206
      %2239 = vst.msk [vmem:[%s221 + $0xf0] sm:$0xff] %vm1689, %v2207
      %2240 = vst.msk [vmem:[%s221 + $0xf8] sm:$0xff] %vm1689, %v2208
      %p2241 = scmp.lt.s32.totalorder %s18, 1
      %s2242 = scalar_select %p2241, %s18, 1
      %p2243 = scmp.lt.s32.totalorder %s19, 0
      %s2244 = scalar_select %p2243, %s19, 0
      %s2245 = smul.addr %s2242, 32
      %s2246 = sadd.s32 %s2244, %s2245
      %s2247 = smul.addr %s2246, 8
      %s2248 = scalar_lea.vmem %s3, %s2247
      // Predicated region
      $region33: #{tpu_custom_call.1} parent=31 // pred_check
        %p2249 = pneg %p124
      $region34: #{tpu_custom_call.1} parent=31 // pred_check_branch
        %2251 = sbr.rel (%p2249) target = $region36
      $region35: #{tpu_custom_call.1} parent=31 // pred_region
        _
      $region36: #{tpu_custom_call.1} parent=31 // pred_fallthru
        _
    $region32: #{tpu_custom_call.1} parent=5 // pred_fallthru
      _
    %p2252 = scmp.le.s32.totalorder 2, %s9
    // Predicated region
    $region37: #{tpu_custom_call.1} parent=5 // pred_check
      %p2253 = pneg %p2252
    $region38: #{tpu_custom_call.1} parent=5 // pred_check_branch
      %2255 = sbr.rel (%p2253) target = $region40
    $region39: #{tpu_custom_call.1} parent=5 // pred_region
      %s2256 = ssub.s32 %s9, 2
      // Predicated region
      $region41: #{tpu_custom_call.1} parent=39 // pred_check
        %p2257 = pneg %p130
      $region42: #{tpu_custom_call.1} parent=39 // pred_check_branch
        %2259 = sbr.rel (%p2257) target = $region44
      $region43: #{tpu_custom_call.1} parent=39 // pred_region
        %p2260 = scmp.lt.s32.totalorder %s20, 1
        %s2261 = scalar_select %p2260, %s20, 1
        %p2262 = scmp.lt.s32.totalorder %s21, 0
        %s2263 = scalar_select %p2262, %s21, 0
        %s2264 = smul.addr %s2261, 32
        %s2265 = sadd.s32 %s2263, %s2264
        %s2266 = smul.addr %s2265, 8
        %s2267 = scalar_lea.vmem %s3, %s2266
      $region44: #{tpu_custom_call.1} parent=39 // pred_fallthru
        _
    $region40: #{tpu_custom_call.1} parent=5 // pred_fallthru
      _
  $region6: #{tpu_custom_call.1} parent=0 // loop_footer
    %s13 = sadd.s32 1, %s9
  $region7: #{tpu_custom_call.1} parent=0 // loop_footer_branch
    %8 = sbr.rel target = $region3
  $region8: #{tpu_custom_call.1} parent=0 // loop_exit
    _

</llo_original>
